<compile_context>
chip_gen: v7x
topology: tpu7x:2x2x1
jax: 0.10.0
libtpu: 0.0.40
codegen_flags: <defaults>
</compile_context>

<pallas_src>
import functools

import jax
import jax.numpy as jnp
from jax.experimental import pallas as pl
from jax.experimental.pallas import tpu as pltpu


def _round_up(v, m):
    return (v + m - 1) // m * m


def gin_scatter_mlp_kernel(dst_ref, msg_ref, w1_ref, b1_ref, w2_ref, b2_ref,
                           out_ref, acc_ref):
    i = pl.program_id(0)            # node-tile index  ("parallel")
    j = pl.program_id(1)            # edge-tile index  ("arbitrary", reduction)

    TN = out_ref.shape[0]
    TE = msg_ref.shape[0]

    @pl.when(j == 0)
    def _init():
        acc_ref[...] = jnp.zeros_like(acc_ref)

    # Scatter-add over destination nodes of this node tile.
    # Padded edges carry dst = -1 and never match any local row; padded
    # message rows are zero anyway.
    dst_local = dst_ref[...] - i * TN                                 # [1, TE]
    row_iota = jax.lax.broadcasted_iota(jnp.int32, (TN, TE), 0)       # [TN, TE]
    oh_dst = (row_iota == dst_local).astype(jnp.bfloat16)             # [TN, TE]

    acc_ref[...] += jnp.dot(oh_dst, msg_ref[...],
                            preferred_element_type=jnp.float32)       # [TN, D_pad]

    @pl.when(j == pl.num_programs(1) - 1)
    def _finalize():
        # Fused MLP: bf16 MXU operands, f32 accumulation, f32 bias adds.
        agg = acc_ref[...].astype(jnp.bfloat16)
        h = jnp.dot(agg, w1_ref[...],
                    preferred_element_type=jnp.float32) + b1_ref[...]
        h = jnp.maximum(h, 0.0).astype(jnp.bfloat16)
        out = jnp.dot(h, w2_ref[...],
                      preferred_element_type=jnp.float32) + b2_ref[...]
        out_ref[...] = out.astype(out_ref.dtype)


@functools.partial(jax.jit, static_argnums=(4, 5, 6))
def gin_conv(x, edge_index, edge_attr, params, num_bond_type=20,
             node_tile=256, edge_tile=512):
    N, D = x.shape
    emb_w, w1, b1, w2, b2 = params
    H = w1.shape[1]                                # 2 * emb_dim

    # --- add_self_loops (fill_value = num_bond_type - 1) -------------------
    loop_idx = jnp.arange(N, dtype=edge_index.dtype)
    ei = jnp.concatenate(
        [edge_index, jnp.stack([loop_idx, loop_idx], axis=0)], axis=1)
    ea = jnp.concatenate(
        [edge_attr, jnp.full((N,), num_bond_type - 1, dtype=edge_attr.dtype)])
    E = ei.shape[1]

    # --- hoisted gather (perf review item #1): per-edge messages in XLA ----
    # messages = x[src] + emb_w[edge_attr]; memory-bound O(E*D) gather, done
    # once, instead of an in-kernel one-hot gather recomputed per node tile.
    msgs = jnp.take(x, ei[1], axis=0) + jnp.take(emb_w, ea, axis=0)   # [E, D] f32

    # --- padded / aligned sizes --------------------------------------------
    TN = node_tile
    TE = edge_tile
    N_pad = _round_up(N, TN)
    E_pad = _round_up(E, TE)          # padded edges: dst = -1, msgs = 0
    D_pad = _round_up(D, 128)         # lane-dense emb dim
    H_pad = _round_up(H, 128)         # lane-dense hidden dim

    # --- padded operands (bf16 MXU operands, f32 biases) -------------------
    msgs_p = jnp.zeros((E_pad, D_pad), jnp.bfloat16).at[:E, :D].set(
        msgs.astype(jnp.bfloat16))
    dst = jnp.full((1, E_pad), -1, jnp.int32).at[0, :E].set(
        ei[0].astype(jnp.int32))
    w1_p = jnp.zeros((D_pad, H_pad), jnp.bfloat16).at[:D, :H].set(
        w1.astype(jnp.bfloat16))
    b1_p = jnp.zeros((1, H_pad), jnp.float32).at[:, :H].set(b1)
    w2_p = jnp.zeros((H_pad, D_pad), jnp.bfloat16).at[:H, :D].set(
        w2.astype(jnp.bfloat16))
    b2_p = jnp.zeros((1, D_pad), jnp.float32).at[:, :D].set(b2)

    # TODO(synk): on v7x (2 TCs) guarantee >= 2 node tiles (split TN) so the
    # "parallel" axis actually shards; irrelevant at these toy sizes.
    grid = (N_pad // TN, E_pad // TE)

    out_pad = pl.pallas_call(
        gin_scatter_mlp_kernel,
        out_shape=jax.ShapeDtypeStruct((N_pad, D_pad), jnp.float32),
        grid=grid,
        in_specs=[
            pl.BlockSpec((1, TE), lambda i, j: (0, j)),          # dst tile
            pl.BlockSpec((TE, D_pad), lambda i, j: (j, 0)),      # message tile
            pl.BlockSpec((D_pad, H_pad), lambda i, j: (0, 0)),   # w1 (resident)
            pl.BlockSpec((1, H_pad), lambda i, j: (0, 0)),       # b1
            pl.BlockSpec((H_pad, D_pad), lambda i, j: (0, 0)),   # w2
            pl.BlockSpec((1, D_pad), lambda i, j: (0, 0)),       # b2
        ],
        out_specs=pl.BlockSpec((TN, D_pad), lambda i, j: (i, 0)),
        scratch_shapes=[
            pltpu.VMEM((TN, D_pad), jnp.float32),   # f32 scatter accumulator
        ],
        compiler_params=pltpu.CompilerParams(
            dimension_semantics=("parallel", "arbitrary"),
            vmem_limit_bytes=48 * 1024 * 1024,
        ),
    )(dst, msgs_p, w1_p, b1_p, w2_p, b2_p)

    return out_pad[:N, :D].astype(x.dtype)


def reference(x, edge_index, edge_attr, params, num_bond_type=20):
    """Pure-JAX f32 reference mirroring the PyTorch forward pass."""
    emb_w, w1, b1, w2, b2 = params
    N, _ = x.shape
    loop_idx = jnp.arange(N, dtype=edge_index.dtype)
    ei = jnp.concatenate([edge_index, jnp.stack([loop_idx, loop_idx], 0)], axis=1)
    ea = jnp.concatenate(
        [edge_attr, jnp.full((N,), num_bond_type - 1, dtype=edge_attr.dtype)])
    edge_emb = emb_w[ea]                                       # embedding lookup
    msgs = x[ei[1]] + edge_emb                                 # gather + add
    agg = jax.ops.segment_sum(msgs, ei[0], num_segments=N)     # scatter_add
    h = jnp.maximum(agg @ w1 + b1, 0.0)
    return h @ w2 + b2


if __name__ == "__main__":
    emb_dim = 32
    num_nodes = 16
    num_edges = 24
    num_bond_type = 20

    key = jax.random.PRNGKey(0)
    k_x, k_ei, k_ea, k_emb, k_w1, k_b1, k_w2, k_b2 = jax.random.split(key, 8)

    x = jax.random.normal(k_x, (num_nodes, emb_dim), dtype=jnp.float32)
    edge_index = jax.random.randint(k_ei, (2, num_edges), 0, num_nodes,
                                    dtype=jnp.int32)
    edge_attr = jax.random.randint(k_ea, (num_edges,), 0, num_bond_type - 1,
                                   dtype=jnp.int32)

    # Deterministic synthetic parameters (shapes from the module __init__).
    emb_bound = (6.0 / (num_bond_type + emb_dim)) ** 0.5
    emb_w = jax.random.uniform(k_emb, (num_bond_type, emb_dim),
                               minval=-emb_bound, maxval=emb_bound,
                               dtype=jnp.float32)
    b1_bound = (1.0 / emb_dim) ** 0.5
    w1 = jax.random.uniform(k_w1, (emb_dim, 2 * emb_dim),
                            minval=-b1_bound, maxval=b1_bound, dtype=jnp.float32)
    b1 = jax.random.uniform(k_b1, (1, 2 * emb_dim),
                            minval=-b1_bound, maxval=b1_bound, dtype=jnp.float32)
    b2_bound = (1.0 / (2 * emb_dim)) ** 0.5
    w2 = jax.random.uniform(k_w2, (2 * emb_dim, emb_dim),
                            minval=-b2_bound, maxval=b2_bound, dtype=jnp.float32)
    b2 = jax.random.uniform(k_b2, (1, emb_dim),
                            minval=-b2_bound, maxval=b2_bound, dtype=jnp.float32)

    params = (emb_w, w1, b1, w2, b2)

    out = gin_conv(x, edge_index, edge_attr, params, num_bond_type)
    out = jax.block_until_ready(out)

    ref = reference(x, edge_index, edge_attr, params, num_bond_type)
    assert out.shape == (num_nodes, emb_dim)
    # Messages and MLP weights go through the MXU in bf16 (f32 accumulation)
    # -> small rounding vs the f32 reference.
    assert jnp.allclose(out, ref, atol=5e-2, rtol=5e-2), "mismatch vs JAX reference"

    print("KERNEL_OK")
</pallas_src>

<mosaic_0001>
module attributes {stable_mosaic.version = 11 : i64} {
  func.func @gin_scatter_mlp_kernel(%arg0: i32, %arg1: i32, %arg2: memref<1x512xi32, #tpu.memory_space<vmem>>, %arg3: memref<512x128xbf16, #tpu.memory_space<vmem>>, %arg4: memref<128x128xbf16, #tpu.memory_space<vmem>>, %arg5: memref<1x128xf32, #tpu.memory_space<vmem>>, %arg6: memref<128x128xbf16, #tpu.memory_space<vmem>>, %arg7: memref<1x128xf32, #tpu.memory_space<vmem>>, %arg8: memref<256x128xf32, #tpu.memory_space<vmem>>, %arg9: memref<256x128xf32, #tpu.memory_space<vmem>>) attributes {dimension_semantics = [#tpu.dimension_semantics<parallel>, #tpu.dimension_semantics<arbitrary>], iteration_bounds = array<i64: 1, 1>, scalar_prefetch = 0 : i64, scratch_operands = 1 : i64, tpu.core_type = #tpu.core_type<tc>, window_params = [{transform_indices = @transform_0, window_bounds = array<i64: 1, 512>}, {transform_indices = @transform_1, window_bounds = array<i64: 512, 128>}, {pipeline_mode = #tpu.pipeline_mode<synchronous>, transform_indices = @transform_2, window_bounds = array<i64: 128, 128>}, {pipeline_mode = #tpu.pipeline_mode<synchronous>, transform_indices = @transform_3, window_bounds = array<i64: 1, 128>}, {pipeline_mode = #tpu.pipeline_mode<synchronous>, transform_indices = @transform_4, window_bounds = array<i64: 128, 128>}, {pipeline_mode = #tpu.pipeline_mode<synchronous>, transform_indices = @transform_5, window_bounds = array<i64: 1, 128>}, {transform_indices = @transform_6, window_bounds = array<i64: 256, 128>}]} {
    %c0_i32 = arith.constant 0 : i32
    %0 = arith.cmpi eq, %arg1, %c0_i32 : i32
    %1 = arith.extui %0 : i1 to i32
    %c0_i32_0 = arith.constant 0 : i32
    %2 = arith.cmpi ne, %1, %c0_i32_0 : i32
    scf.if %2 {
      %cst_10 = arith.constant 0.000000e+00 : f32
      %21 = vector.broadcast %cst_10 : f32 to vector<256x128xf32>
      %c0_11 = arith.constant 0 : index
      %c0_12 = arith.constant 0 : index
      %22 = vector.load %arg9[%c0_11, %c0_12] : memref<256x128xf32, #tpu.memory_space<vmem>>, vector<256x128xf32>
      tpu.vector_store %arg9[%c0_11, %c0_12], %21 {strides = array<i32>} : memref<256x128xf32, #tpu.memory_space<vmem>>, vector<256x128xf32>,
    } else {
    }
    %c0 = arith.constant 0 : index
    %c0_1 = arith.constant 0 : index
    %3 = vector.load %arg2[%c0, %c0_1] : memref<1x512xi32, #tpu.memory_space<vmem>>, vector<1x512xi32>
    %c256_i32 = arith.constant 256 : i32
    %4 = arith.muli %arg0, %c256_i32 : i32
    %5 = vector.broadcast %4 : i32 to vector<1x512xi32>
    %6 = arith.subi %3, %5 : vector<1x512xi32>
    %7 = tpu.iota {dimensions = array<i32: 0>} : vector<256x512xi32>
    %8 = vector.broadcast %6 : vector<1x512xi32> to vector<256x512xi32>
    %9 = arith.cmpi eq, %7, %8 : vector<256x512xi32>
    %10 = arith.extui %9 : vector<256x512xi1> to vector<256x512xi32>
    %11 = arith.sitofp %10 : vector<256x512xi32> to vector<256x512xf32>
    %12 = arith.truncf %11 : vector<256x512xf32> to vector<256x512xbf16>
    %c0_2 = arith.constant 0 : index
    %c0_3 = arith.constant 0 : index
    %13 = vector.load %arg9[%c0_2, %c0_3] : memref<256x128xf32, #tpu.memory_space<vmem>>, vector<256x128xf32>
    %c0_4 = arith.constant 0 : index
    %c0_5 = arith.constant 0 : index
    %14 = vector.load %arg3[%c0_4, %c0_5] : memref<512x128xbf16, #tpu.memory_space<vmem>>, vector<512x128xbf16>
    %cst = arith.constant dense<0.000000e+00> : vector<256x128xf32>
    %15 = tpu.matmul %12, %14, %cst {dimension_numbers = #tpu.dot_dimension_numbers<[1], [0], [0], [1], [0, 0, 1, 1], [], []>} : vector<256x512xbf16>, vector<512x128xbf16>, vector<256x128xf32> -> vector<256x128xf32>
    %16 = arith.addf %13, %15 : vector<256x128xf32>
    %c0_6 = arith.constant 0 : index
    %c0_7 = arith.constant 0 : index
    %17 = vector.load %arg9[%c0_6, %c0_7] : memref<256x128xf32, #tpu.memory_space<vmem>>, vector<256x128xf32>
    tpu.vector_store %arg9[%c0_6, %c0_7], %16 {strides = array<i32>} : memref<256x128xf32, #tpu.memory_space<vmem>>, vector<256x128xf32>,
    %c0_i32_8 = arith.constant 0 : i32
    %18 = arith.cmpi eq, %arg1, %c0_i32_8 : i32
    %19 = arith.extui %18 : i1 to i32
    %c0_i32_9 = arith.constant 0 : i32
    %20 = arith.cmpi ne, %19, %c0_i32_9 : i32
    scf.if %20 {
      %c0_10 = arith.constant 0 : index
      %c0_11 = arith.constant 0 : index
      %21 = vector.load %arg9[%c0_10, %c0_11] : memref<256x128xf32, #tpu.memory_space<vmem>>, vector<256x128xf32>
      %22 = arith.truncf %21 : vector<256x128xf32> to vector<256x128xbf16>
      %c0_12 = arith.constant 0 : index
      %c0_13 = arith.constant 0 : index
      %23 = vector.load %arg4[%c0_12, %c0_13] : memref<128x128xbf16, #tpu.memory_space<vmem>>, vector<128x128xbf16>
      %cst_14 = arith.constant dense<0.000000e+00> : vector<256x128xf32>
      %24 = tpu.matmul %22, %23, %cst_14 {dimension_numbers = #tpu.dot_dimension_numbers<[1], [0], [0], [1], [0, 0, 1, 1], [], []>} : vector<256x128xbf16>, vector<128x128xbf16>, vector<256x128xf32> -> vector<256x128xf32>
      %c0_15 = arith.constant 0 : index
      %c0_16 = arith.constant 0 : index
      %25 = vector.load %arg5[%c0_15, %c0_16] : memref<1x128xf32, #tpu.memory_space<vmem>>, vector<1x128xf32>
      %26 = vector.broadcast %25 : vector<1x128xf32> to vector<256x128xf32>
      %27 = arith.addf %24, %26 : vector<256x128xf32>
      %cst_17 = arith.constant 0.000000e+00 : f32
      %28 = vector.broadcast %cst_17 : f32 to vector<256x128xf32>
      %29 = arith.maximumf %27, %28 : vector<256x128xf32>
      %30 = arith.truncf %29 : vector<256x128xf32> to vector<256x128xbf16>
      %c0_18 = arith.constant 0 : index
      %c0_19 = arith.constant 0 : index
      %31 = vector.load %arg6[%c0_18, %c0_19] : memref<128x128xbf16, #tpu.memory_space<vmem>>, vector<128x128xbf16>
      %cst_20 = arith.constant dense<0.000000e+00> : vector<256x128xf32>
      %32 = tpu.matmul %30, %31, %cst_20 {dimension_numbers = #tpu.dot_dimension_numbers<[1], [0], [0], [1], [0, 0, 1, 1], [], []>} : vector<256x128xbf16>, vector<128x128xbf16>, vector<256x128xf32> -> vector<256x128xf32>
      %c0_21 = arith.constant 0 : index
      %c0_22 = arith.constant 0 : index
      %33 = vector.load %arg7[%c0_21, %c0_22] : memref<1x128xf32, #tpu.memory_space<vmem>>, vector<1x128xf32>
      %34 = vector.broadcast %33 : vector<1x128xf32> to vector<256x128xf32>
      %35 = arith.addf %32, %34 : vector<256x128xf32>
      %c0_23 = arith.constant 0 : index
      %c0_24 = arith.constant 0 : index
      %36 = vector.load %arg8[%c0_23, %c0_24] : memref<256x128xf32, #tpu.memory_space<vmem>>, vector<256x128xf32>
      tpu.vector_store %arg8[%c0_23, %c0_24], %35 {strides = array<i32>} : memref<256x128xf32, #tpu.memory_space<vmem>>, vector<256x128xf32>,
    } else {
    }
    return
  }
  func.func @transform_0(%arg0: i32, %arg1: i32) -> (i32, i32) {
    %c0_i32 = arith.constant 0 : i32
    %c0_i32_0 = arith.constant 0 : i32
    return %c0_i32, %arg1 : i32, i32
  }
  func.func @transform_1(%arg0: i32, %arg1: i32) -> (i32, i32) {
    %c0_i32 = arith.constant 0 : i32
    %c0_i32_0 = arith.constant 0 : i32
    return %arg1, %c0_i32 : i32, i32
  }
  func.func @transform_2(%arg0: i32, %arg1: i32) -> (i32, i32) {
    %c0_i32 = arith.constant 0 : i32
    %c0_i32_0 = arith.constant 0 : i32
    %c0_i32_1 = arith.constant 0 : i32
    return %c0_i32, %c0_i32_0 : i32, i32
  }
  func.func @transform_3(%arg0: i32, %arg1: i32) -> (i32, i32) {
    %c0_i32 = arith.constant 0 : i32
    %c0_i32_0 = arith.constant 0 : i32
    %c0_i32_1 = arith.constant 0 : i32
    return %c0_i32, %c0_i32_0 : i32, i32
  }
  func.func @transform_4(%arg0: i32, %arg1: i32) -> (i32, i32) {
    %c0_i32 = arith.constant 0 : i32
    %c0_i32_0 = arith.constant 0 : i32
    %c0_i32_1 = arith.constant 0 : i32
    return %c0_i32, %c0_i32_0 : i32, i32
  }
  func.func @transform_5(%arg0: i32, %arg1: i32) -> (i32, i32) {
    %c0_i32 = arith.constant 0 : i32
    %c0_i32_0 = arith.constant 0 : i32
    %c0_i32_1 = arith.constant 0 : i32
    return %c0_i32, %c0_i32_0 : i32, i32
  }
  func.func @transform_6(%arg0: i32, %arg1: i32) -> (i32, i32) {
    %c0_i32 = arith.constant 0 : i32
    %c0_i32_0 = arith.constant 0 : i32
    return %arg0, %c0_i32 : i32, i32
  }
}

</mosaic_0001>

<llo_original>
// kernel: gin_conv.1
$region0: #{gin_conv.1}
  #allocation0 [shape = 'u32[]', space=smem, size = 0x4, offset = 0x4, fixed_abs, tag = 'smem constant byte address 0x4 - core index']
  #allocation1 [shape = 'u32[144,128]{1,0:T(1,128)}', space=vmem, size = 0x12000, scoped, tag = 'internal scratch']
  #allocation2 [shape = 'f32[256,128]{1,0:T(8,128)}', space=vmem, size = 0x20000, scoped, tag = 'scratch operand']
  %s0 = inlined_call_operand.vmem [shape: s32[1,512], index: 0, kind: input, shape index: {}]
  %s1 = inlined_call_operand.vmem [shape: bf16[512,128], index: 1, kind: input, shape index: {}]
  %s2 = inlined_call_operand.vmem [shape: bf16[128,128], index: 2, kind: input, shape index: {}]
  %s3 = inlined_call_operand.vmem [shape: f32[1,128], index: 3, kind: input, shape index: {}]
  %s4 = inlined_call_operand.vmem [shape: bf16[128,128], index: 4, kind: input, shape index: {}]
  %s5 = inlined_call_operand.vmem [shape: f32[1,128], index: 5, kind: input, shape index: {}]
  %s6 = inlined_call_operand.vmem [shape: f32[256,128], index: 6, kind: output, shape index: {}]
  %s7 = sld [smem:[#allocation0]]
  $region42: #{gin_conv.1} parent=0
    _
  %s9 = ssub.s32 1, %s7
  %s10 = scalar_select 0, %s9, %s7
  // Predicated region
  $region2: #{gin_conv.1} parent=0 // pred_check
    _
  $region3: #{gin_conv.1} parent=0 // pred_check_branch
    %12 = sbr.rel (0) target = $region5
  $region4: #{gin_conv.1} parent=0 // pred_region
    _
  $region5: #{gin_conv.1} parent=0 // pred_fallthru
    _
  // Predicated region
  $region6: #{gin_conv.1} parent=0 // pred_check
    _
  $region7: #{gin_conv.1} parent=0 // pred_check_branch
    %14 = sbr.rel (0) target = $region9
  $region8: #{gin_conv.1} parent=0 // pred_region
    _
  $region9: #{gin_conv.1} parent=0 // pred_fallthru
    _
  // Predicated region
  $region10: #{gin_conv.1} parent=0 // pred_check
    _
  $region11: #{gin_conv.1} parent=0 // pred_check_branch
    %16 = sbr.rel (0) target = $region13
  $region12: #{gin_conv.1} parent=0 // pred_region
    _
  $region13: #{gin_conv.1} parent=0 // pred_fallthru
    _
  // Predicated region
  $region14: #{gin_conv.1} parent=0 // pred_check
    _
  $region15: #{gin_conv.1} parent=0 // pred_check_branch
    %18 = sbr.rel (0) target = $region17
  $region16: #{gin_conv.1} parent=0 // pred_region
    _
  $region17: #{gin_conv.1} parent=0 // pred_fallthru
    _
  // Predicated region
  $region18: #{gin_conv.1} parent=0 // pred_check
    _
  $region19: #{gin_conv.1} parent=0 // pred_check_branch
    %20 = sbr.rel (0) target = $region21
  $region20: #{gin_conv.1} parent=0 // pred_region
    _
  $region21: #{gin_conv.1} parent=0 // pred_fallthru
    _
  // Predicated region
  $region22: #{gin_conv.1} parent=0 // pred_check
    _
  $region23: #{gin_conv.1} parent=0 // pred_check_branch
    %22 = sbr.rel (0) target = $region25
  $region24: #{gin_conv.1} parent=0 // pred_region
    _
  $region25: #{gin_conv.1} parent=0 // pred_fallthru
    _
  %p24 = scmp.eq.s32.totalorder 0, 0
  // Predicated region
  $region26: #{gin_conv.1} parent=0 // pred_check
    %p25 = pneg %p24
  $region27: #{gin_conv.1} parent=0 // pred_check_branch
    %27 = sbr.rel (%p25) target = $region29
  $region28: #{gin_conv.1} parent=0 // pred_region
    %28 = vst [vmem:[#allocation2] sm:$0xff] 0.0
    %29 = vst [vmem:[#allocation2 + $0x8] sm:$0xff] 0.0
    %30 = vst [vmem:[#allocation2 + $0x10] sm:$0xff] 0.0
    %31 = vst [vmem:[#allocation2 + $0x18] sm:$0xff] 0.0
    %32 = vst [vmem:[#allocation2 + $0x20] sm:$0xff] 0.0
    %33 = vst [vmem:[#allocation2 + $0x28] sm:$0xff] 0.0
    %34 = vst [vmem:[#allocation2 + $0x30] sm:$0xff] 0.0
    %35 = vst [vmem:[#allocation2 + $0x38] sm:$0xff] 0.0
    %36 = vst [vmem:[#allocation2 + $0x40] sm:$0xff] 0.0
    %37 = vst [vmem:[#allocation2 + $0x48] sm:$0xff] 0.0
    %38 = vst [vmem:[#allocation2 + $0x50] sm:$0xff] 0.0
    %39 = vst [vmem:[#allocation2 + $0x58] sm:$0xff] 0.0
    %40 = vst [vmem:[#allocation2 + $0x60] sm:$0xff] 0.0
    %41 = vst [vmem:[#allocation2 + $0x68] sm:$0xff] 0.0
    %42 = vst [vmem:[#allocation2 + $0x70] sm:$0xff] 0.0
    %43 = vst [vmem:[#allocation2 + $0x78] sm:$0xff] 0.0
    %44 = vst [vmem:[#allocation2 + $0x80] sm:$0xff] 0.0
    %45 = vst [vmem:[#allocation2 + $0x88] sm:$0xff] 0.0
    %46 = vst [vmem:[#allocation2 + $0x90] sm:$0xff] 0.0
    %47 = vst [vmem:[#allocation2 + $0x98] sm:$0xff] 0.0
    %48 = vst [vmem:[#allocation2 + $0xa0] sm:$0xff] 0.0
    %49 = vst [vmem:[#allocation2 + $0xa8] sm:$0xff] 0.0
    %50 = vst [vmem:[#allocation2 + $0xb0] sm:$0xff] 0.0
    %51 = vst [vmem:[#allocation2 + $0xb8] sm:$0xff] 0.0
    %52 = vst [vmem:[#allocation2 + $0xc0] sm:$0xff] 0.0
    %53 = vst [vmem:[#allocation2 + $0xc8] sm:$0xff] 0.0
    %54 = vst [vmem:[#allocation2 + $0xd0] sm:$0xff] 0.0
    %55 = vst [vmem:[#allocation2 + $0xd8] sm:$0xff] 0.0
    %56 = vst [vmem:[#allocation2 + $0xe0] sm:$0xff] 0.0
    %57 = vst [vmem:[#allocation2 + $0xe8] sm:$0xff] 0.0
    %58 = vst [vmem:[#allocation2 + $0xf0] sm:$0xff] 0.0
    %59 = vst [vmem:[#allocation2 + $0xf8] sm:$0xff] 0.0
  $region29: #{gin_conv.1} parent=0 // pred_fallthru
    _
  %v60 = vld [vmem:[%s0] sm:$0xf]
  %s61 = smul.u32 0, 256
  %v62 = vstv %s61
  %v63 = vsub.s32 %v60, %v62
  %v64 = vlaneseq
  %v65 = vshrl.u32 %v64, 7
  %v66 = vadd.s32 %v65, 8
  %v67 = vadd.s32 %v65, 16
  %v68 = vadd.s32 %v65, 24
  %v69 = vadd.s32 %v65, 32
  %v70 = vadd.s32 %v65, 40
  %v71 = vadd.s32 %v65, 48
  %v72 = vadd.s32 %v65, 56
  %v73 = vadd.s32 %v65, 64
  %v74 = vadd.s32 %v65, 72
  %v75 = vadd.s32 %v65, 80
  %v76 = vadd.s32 %v65, 88
  %v77 = vadd.s32 %v65, 96
  %v78 = vadd.s32 %v65, 104
  %v79 = vadd.s32 %v65, 112
  %v80 = vadd.s32 %v65, 120
  %v81 = vadd.s32 %v65, 128
  %v82 = vadd.s32 %v65, 136
  %v83 = vadd.s32 %v65, 144
  %v84 = vadd.s32 %v65, 152
  %v85 = vadd.s32 %v65, 160
  %v86 = vadd.s32 %v65, 168
  %v87 = vadd.s32 %v65, 176
  %v88 = vadd.s32 %v65, 184
  %v89 = vadd.s32 %v65, 192
  %v90 = vadd.s32 %v65, 200
  %v91 = vadd.s32 %v65, 208
  %v92 = vadd.s32 %v65, 216
  %v93 = vadd.s32 %v65, 224
  %v94 = vadd.s32 %v65, 232
  %v95 = vadd.s32 %v65, 240
  %v96 = vadd.s32 %v65, 248
  %v97 = vlaneseq
  %v98 = vshrl.u32 %v97, 7
  %v99 = vsub.s32 0, %v98
  %v100 = vrot.slane %v63, %v99
  %v101 = vlaneseq
  %v102 = vshrl.u32 %v101, 7
  %v103 = vsub.s32 1, %v102
  %v104 = vrot.slane %v63, %v103
  %v105 = vlaneseq
  %v106 = vshrl.u32 %v105, 7
  %v107 = vsub.s32 2, %v106
  %v108 = vrot.slane %v63, %v107
  %v109 = vlaneseq
  %v110 = vshrl.u32 %v109, 7
  %v111 = vsub.s32 3, %v110
  %v112 = vrot.slane %v63, %v111
  %vm113 = vcmp.eq.s32.totalorder %v65, %v100
  %vm114 = vcmp.eq.s32.totalorder %v65, %v104
  %vm115 = vcmp.eq.s32.totalorder %v65, %v108
  %vm116 = vcmp.eq.s32.totalorder %v65, %v112
  %vm117 = vcmp.eq.s32.totalorder %v66, %v100
  %vm118 = vcmp.eq.s32.totalorder %v66, %v104
  %vm119 = vcmp.eq.s32.totalorder %v66, %v108
  %vm120 = vcmp.eq.s32.totalorder %v66, %v112
  %vm121 = vcmp.eq.s32.totalorder %v67, %v100
  %vm122 = vcmp.eq.s32.totalorder %v67, %v104
  %vm123 = vcmp.eq.s32.totalorder %v67, %v108
  %vm124 = vcmp.eq.s32.totalorder %v67, %v112
  %vm125 = vcmp.eq.s32.totalorder %v68, %v100
  %vm126 = vcmp.eq.s32.totalorder %v68, %v104
  %vm127 = vcmp.eq.s32.totalorder %v68, %v108
  %vm128 = vcmp.eq.s32.totalorder %v68, %v112
  %vm129 = vcmp.eq.s32.totalorder %v69, %v100
  %vm130 = vcmp.eq.s32.totalorder %v69, %v104
  %vm131 = vcmp.eq.s32.totalorder %v69, %v108
  %vm132 = vcmp.eq.s32.totalorder %v69, %v112
  %vm133 = vcmp.eq.s32.totalorder %v70, %v100
  %vm134 = vcmp.eq.s32.totalorder %v70, %v104
  %vm135 = vcmp.eq.s32.totalorder %v70, %v108
  %vm136 = vcmp.eq.s32.totalorder %v70, %v112
  %vm137 = vcmp.eq.s32.totalorder %v71, %v100
  %vm138 = vcmp.eq.s32.totalorder %v71, %v104
  %vm139 = vcmp.eq.s32.totalorder %v71, %v108
  %vm140 = vcmp.eq.s32.totalorder %v71, %v112
  %vm141 = vcmp.eq.s32.totalorder %v72, %v100
  %vm142 = vcmp.eq.s32.totalorder %v72, %v104
  %vm143 = vcmp.eq.s32.totalorder %v72, %v108
  %vm144 = vcmp.eq.s32.totalorder %v72, %v112
  %vm145 = vcmp.eq.s32.totalorder %v73, %v100
  %vm146 = vcmp.eq.s32.totalorder %v73, %v104
  %vm147 = vcmp.eq.s32.totalorder %v73, %v108
  %vm148 = vcmp.eq.s32.totalorder %v73, %v112
  %vm149 = vcmp.eq.s32.totalorder %v74, %v100
  %vm150 = vcmp.eq.s32.totalorder %v74, %v104
  %vm151 = vcmp.eq.s32.totalorder %v74, %v108
  %vm152 = vcmp.eq.s32.totalorder %v74, %v112
  %vm153 = vcmp.eq.s32.totalorder %v75, %v100
  %vm154 = vcmp.eq.s32.totalorder %v75, %v104
  %vm155 = vcmp.eq.s32.totalorder %v75, %v108
  %vm156 = vcmp.eq.s32.totalorder %v75, %v112
  %vm157 = vcmp.eq.s32.totalorder %v76, %v100
  %vm158 = vcmp.eq.s32.totalorder %v76, %v104
  %vm159 = vcmp.eq.s32.totalorder %v76, %v108
  %vm160 = vcmp.eq.s32.totalorder %v76, %v112
  %vm161 = vcmp.eq.s32.totalorder %v77, %v100
  %vm162 = vcmp.eq.s32.totalorder %v77, %v104
  %vm163 = vcmp.eq.s32.totalorder %v77, %v108
  %vm164 = vcmp.eq.s32.totalorder %v77, %v112
  %vm165 = vcmp.eq.s32.totalorder %v78, %v100
  %vm166 = vcmp.eq.s32.totalorder %v78, %v104
  %vm167 = vcmp.eq.s32.totalorder %v78, %v108
  %vm168 = vcmp.eq.s32.totalorder %v78, %v112
  %vm169 = vcmp.eq.s32.totalorder %v79, %v100
  %vm170 = vcmp.eq.s32.totalorder %v79, %v104
  %vm171 = vcmp.eq.s32.totalorder %v79, %v108
  %vm172 = vcmp.eq.s32.totalorder %v79, %v112
  %vm173 = vcmp.eq.s32.totalorder %v80, %v100
  %vm174 = vcmp.eq.s32.totalorder %v80, %v104
  %vm175 = vcmp.eq.s32.totalorder %v80, %v108
  %vm176 = vcmp.eq.s32.totalorder %v80, %v112
  %vm177 = vcmp.eq.s32.totalorder %v81, %v100
  %vm178 = vcmp.eq.s32.totalorder %v81, %v104
  %vm179 = vcmp.eq.s32.totalorder %v81, %v108
  %vm180 = vcmp.eq.s32.totalorder %v81, %v112
  %vm181 = vcmp.eq.s32.totalorder %v82, %v100
  %vm182 = vcmp.eq.s32.totalorder %v82, %v104
  %vm183 = vcmp.eq.s32.totalorder %v82, %v108
  %vm184 = vcmp.eq.s32.totalorder %v82, %v112
  %vm185 = vcmp.eq.s32.totalorder %v83, %v100
  %vm186 = vcmp.eq.s32.totalorder %v83, %v104
  %vm187 = vcmp.eq.s32.totalorder %v83, %v108
  %vm188 = vcmp.eq.s32.totalorder %v83, %v112
  %vm189 = vcmp.eq.s32.totalorder %v84, %v100
  %vm190 = vcmp.eq.s32.totalorder %v84, %v104
  %vm191 = vcmp.eq.s32.totalorder %v84, %v108
  %vm192 = vcmp.eq.s32.totalorder %v84, %v112
  %vm193 = vcmp.eq.s32.totalorder %v85, %v100
  %vm194 = vcmp.eq.s32.totalorder %v85, %v104
  %vm195 = vcmp.eq.s32.totalorder %v85, %v108
  %vm196 = vcmp.eq.s32.totalorder %v85, %v112
  %vm197 = vcmp.eq.s32.totalorder %v86, %v100
  %vm198 = vcmp.eq.s32.totalorder %v86, %v104
  %vm199 = vcmp.eq.s32.totalorder %v86, %v108
  %vm200 = vcmp.eq.s32.totalorder %v86, %v112
  %vm201 = vcmp.eq.s32.totalorder %v87, %v100
  %vm202 = vcmp.eq.s32.totalorder %v87, %v104
  %vm203 = vcmp.eq.s32.totalorder %v87, %v108
  %vm204 = vcmp.eq.s32.totalorder %v87, %v112
  %vm205 = vcmp.eq.s32.totalorder %v88, %v100
  %vm206 = vcmp.eq.s32.totalorder %v88, %v104
  %vm207 = vcmp.eq.s32.totalorder %v88, %v108
  %vm208 = vcmp.eq.s32.totalorder %v88, %v112
  %vm209 = vcmp.eq.s32.totalorder %v89, %v100
  %vm210 = vcmp.eq.s32.totalorder %v89, %v104
  %vm211 = vcmp.eq.s32.totalorder %v89, %v108
  %vm212 = vcmp.eq.s32.totalorder %v89, %v112
  %vm213 = vcmp.eq.s32.totalorder %v90, %v100
  %vm214 = vcmp.eq.s32.totalorder %v90, %v104
  %vm215 = vcmp.eq.s32.totalorder %v90, %v108
  %vm216 = vcmp.eq.s32.totalorder %v90, %v112
  %vm217 = vcmp.eq.s32.totalorder %v91, %v100
  %vm218 = vcmp.eq.s32.totalorder %v91, %v104
  %vm219 = vcmp.eq.s32.totalorder %v91, %v108
  %vm220 = vcmp.eq.s32.totalorder %v91, %v112
  %vm221 = vcmp.eq.s32.totalorder %v92, %v100
  %vm222 = vcmp.eq.s32.totalorder %v92, %v104
  %vm223 = vcmp.eq.s32.totalorder %v92, %v108
  %vm224 = vcmp.eq.s32.totalorder %v92, %v112
  %vm225 = vcmp.eq.s32.totalorder %v93, %v100
  %vm226 = vcmp.eq.s32.totalorder %v93, %v104
  %vm227 = vcmp.eq.s32.totalorder %v93, %v108
  %vm228 = vcmp.eq.s32.totalorder %v93, %v112
  %vm229 = vcmp.eq.s32.totalorder %v94, %v100
  %vm230 = vcmp.eq.s32.totalorder %v94, %v104
  %vm231 = vcmp.eq.s32.totalorder %v94, %v108
  %vm232 = vcmp.eq.s32.totalorder %v94, %v112
  %vm233 = vcmp.eq.s32.totalorder %v95, %v100
  %vm234 = vcmp.eq.s32.totalorder %v95, %v104
  %vm235 = vcmp.eq.s32.totalorder %v95, %v108
  %vm236 = vcmp.eq.s32.totalorder %v95, %v112
  %vm237 = vcmp.eq.s32.totalorder %v96, %v100
  %vm238 = vcmp.eq.s32.totalorder %v96, %v104
  %vm239 = vcmp.eq.s32.totalorder %v96, %v108
  %vm240 = vcmp.eq.s32.totalorder %v96, %v112
  %v241 = vsel %vm113, 1, 0
  %v242 = vsel %vm114, 1, 0
  %v243 = vsel %vm115, 1, 0
  %v244 = vsel %vm116, 1, 0
  %v245 = vsel %vm117, 1, 0
  %v246 = vsel %vm118, 1, 0
  %v247 = vsel %vm119, 1, 0
  %v248 = vsel %vm120, 1, 0
  %v249 = vsel %vm121, 1, 0
  %v250 = vsel %vm122, 1, 0
  %v251 = vsel %vm123, 1, 0
  %v252 = vsel %vm124, 1, 0
  %v253 = vsel %vm125, 1, 0
  %v254 = vsel %vm126, 1, 0
  %v255 = vsel %vm127, 1, 0
  %v256 = vsel %vm128, 1, 0
  %v257 = vsel %vm129, 1, 0
  %v258 = vsel %vm130, 1, 0
  %v259 = vsel %vm131, 1, 0
  %v260 = vsel %vm132, 1, 0
  %v261 = vsel %vm133, 1, 0
  %v262 = vsel %vm134, 1, 0
  %v263 = vsel %vm135, 1, 0
  %v264 = vsel %vm136, 1, 0
  %v265 = vsel %vm137, 1, 0
  %v266 = vsel %vm138, 1, 0
  %v267 = vsel %vm139, 1, 0
  %v268 = vsel %vm140, 1, 0
  %v269 = vsel %vm141, 1, 0
  %v270 = vsel %vm142, 1, 0
  %v271 = vsel %vm143, 1, 0
  %v272 = vsel %vm144, 1, 0
  %v273 = vsel %vm145, 1, 0
  %v274 = vsel %vm146, 1, 0
  %v275 = vsel %vm147, 1, 0
  %v276 = vsel %vm148, 1, 0
  %v277 = vsel %vm149, 1, 0
  %v278 = vsel %vm150, 1, 0
  %v279 = vsel %vm151, 1, 0
  %v280 = vsel %vm152, 1, 0
  %v281 = vsel %vm153, 1, 0
  %v282 = vsel %vm154, 1, 0
  %v283 = vsel %vm155, 1, 0
  %v284 = vsel %vm156, 1, 0
  %v285 = vsel %vm157, 1, 0
  %v286 = vsel %vm158, 1, 0
  %v287 = vsel %vm159, 1, 0
  %v288 = vsel %vm160, 1, 0
  %v289 = vsel %vm161, 1, 0
  %v290 = vsel %vm162, 1, 0
  %v291 = vsel %vm163, 1, 0
  %v292 = vsel %vm164, 1, 0
  %v293 = vsel %vm165, 1, 0
  %v294 = vsel %vm166, 1, 0
  %v295 = vsel %vm167, 1, 0
  %v296 = vsel %vm168, 1, 0
  %v297 = vsel %vm169, 1, 0
  %v298 = vsel %vm170, 1, 0
  %v299 = vsel %vm171, 1, 0
  %v300 = vsel %vm172, 1, 0
  %v301 = vsel %vm173, 1, 0
  %v302 = vsel %vm174, 1, 0
  %v303 = vsel %vm175, 1, 0
  %v304 = vsel %vm176, 1, 0
  %v305 = vsel %vm177, 1, 0
  %v306 = vsel %vm178, 1, 0
  %v307 = vsel %vm179, 1, 0
  %v308 = vsel %vm180, 1, 0
  %v309 = vsel %vm181, 1, 0
  %v310 = vsel %vm182, 1, 0
  %v311 = vsel %vm183, 1, 0
  %v312 = vsel %vm184, 1, 0
  %v313 = vsel %vm185, 1, 0
  %v314 = vsel %vm186, 1, 0
  %v315 = vsel %vm187, 1, 0
  %v316 = vsel %vm188, 1, 0
  %v317 = vsel %vm189, 1, 0
  %v318 = vsel %vm190, 1, 0
  %v319 = vsel %vm191, 1, 0
  %v320 = vsel %vm192, 1, 0
  %v321 = vsel %vm193, 1, 0
  %v322 = vsel %vm194, 1, 0
  %v323 = vsel %vm195, 1, 0
  %v324 = vsel %vm196, 1, 0
  %v325 = vsel %vm197, 1, 0
  %v326 = vsel %vm198, 1, 0
  %v327 = vsel %vm199, 1, 0
  %v328 = vsel %vm200, 1, 0
  %v329 = vsel %vm201, 1, 0
  %v330 = vsel %vm202, 1, 0
  %v331 = vsel %vm203, 1, 0
  %v332 = vsel %vm204, 1, 0
  %v333 = vsel %vm205, 1, 0
  %v334 = vsel %vm206, 1, 0
  %v335 = vsel %vm207, 1, 0
  %v336 = vsel %vm208, 1, 0
  %v337 = vsel %vm209, 1, 0
  %v338 = vsel %vm210, 1, 0
  %v339 = vsel %vm211, 1, 0
  %v340 = vsel %vm212, 1, 0
  %v341 = vsel %vm213, 1, 0
  %v342 = vsel %vm214, 1, 0
  %v343 = vsel %vm215, 1, 0
  %v344 = vsel %vm216, 1, 0
  %v345 = vsel %vm217, 1, 0
  %v346 = vsel %vm218, 1, 0
  %v347 = vsel %vm219, 1, 0
  %v348 = vsel %vm220, 1, 0
  %v349 = vsel %vm221, 1, 0
  %v350 = vsel %vm222, 1, 0
  %v351 = vsel %vm223, 1, 0
  %v352 = vsel %vm224, 1, 0
  %v353 = vsel %vm225, 1, 0
  %v354 = vsel %vm226, 1, 0
  %v355 = vsel %vm227, 1, 0
  %v356 = vsel %vm228, 1, 0
  %v357 = vsel %vm229, 1, 0
  %v358 = vsel %vm230, 1, 0
  %v359 = vsel %vm231, 1, 0
  %v360 = vsel %vm232, 1, 0
  %v361 = vsel %vm233, 1, 0
  %v362 = vsel %vm234, 1, 0
  %v363 = vsel %vm235, 1, 0
  %v364 = vsel %vm236, 1, 0
  %v365 = vsel %vm237, 1, 0
  %v366 = vsel %vm238, 1, 0
  %v367 = vsel %vm239, 1, 0
  %v368 = vsel %vm240, 1, 0
  %v369 = vcvt.s32.f32 %v241
  %v370 = vcvt.s32.f32 %v242
  %v371 = vcvt.s32.f32 %v243
  %v372 = vcvt.s32.f32 %v244
  %v373 = vcvt.s32.f32 %v245
  %v374 = vcvt.s32.f32 %v246
  %v375 = vcvt.s32.f32 %v247
  %v376 = vcvt.s32.f32 %v248
  %v377 = vcvt.s32.f32 %v249
  %v378 = vcvt.s32.f32 %v250
  %v379 = vcvt.s32.f32 %v251
  %v380 = vcvt.s32.f32 %v252
  %v381 = vcvt.s32.f32 %v253
  %v382 = vcvt.s32.f32 %v254
  %v383 = vcvt.s32.f32 %v255
  %v384 = vcvt.s32.f32 %v256
  %v385 = vcvt.s32.f32 %v257
  %v386 = vcvt.s32.f32 %v258
  %v387 = vcvt.s32.f32 %v259
  %v388 = vcvt.s32.f32 %v260
  %v389 = vcvt.s32.f32 %v261
  %v390 = vcvt.s32.f32 %v262
  %v391 = vcvt.s32.f32 %v263
  %v392 = vcvt.s32.f32 %v264
  %v393 = vcvt.s32.f32 %v265
  %v394 = vcvt.s32.f32 %v266
  %v395 = vcvt.s32.f32 %v267
  %v396 = vcvt.s32.f32 %v268
  %v397 = vcvt.s32.f32 %v269
  %v398 = vcvt.s32.f32 %v270
  %v399 = vcvt.s32.f32 %v271
  %v400 = vcvt.s32.f32 %v272
  %v401 = vcvt.s32.f32 %v273
  %v402 = vcvt.s32.f32 %v274
  %v403 = vcvt.s32.f32 %v275
  %v404 = vcvt.s32.f32 %v276
  %v405 = vcvt.s32.f32 %v277
  %v406 = vcvt.s32.f32 %v278
  %v407 = vcvt.s32.f32 %v279
  %v408 = vcvt.s32.f32 %v280
  %v409 = vcvt.s32.f32 %v281
  %v410 = vcvt.s32.f32 %v282
  %v411 = vcvt.s32.f32 %v283
  %v412 = vcvt.s32.f32 %v284
  %v413 = vcvt.s32.f32 %v285
  %v414 = vcvt.s32.f32 %v286
  %v415 = vcvt.s32.f32 %v287
  %v416 = vcvt.s32.f32 %v288
  %v417 = vcvt.s32.f32 %v289
  %v418 = vcvt.s32.f32 %v290
  %v419 = vcvt.s32.f32 %v291
  %v420 = vcvt.s32.f32 %v292
  %v421 = vcvt.s32.f32 %v293
  %v422 = vcvt.s32.f32 %v294
  %v423 = vcvt.s32.f32 %v295
  %v424 = vcvt.s32.f32 %v296
  %v425 = vcvt.s32.f32 %v297
  %v426 = vcvt.s32.f32 %v298
  %v427 = vcvt.s32.f32 %v299
  %v428 = vcvt.s32.f32 %v300
  %v429 = vcvt.s32.f32 %v301
  %v430 = vcvt.s32.f32 %v302
  %v431 = vcvt.s32.f32 %v303
  %v432 = vcvt.s32.f32 %v304
  %v433 = vcvt.s32.f32 %v305
  %v434 = vcvt.s32.f32 %v306
  %v435 = vcvt.s32.f32 %v307
  %v436 = vcvt.s32.f32 %v308
  %v437 = vcvt.s32.f32 %v309
  %v438 = vcvt.s32.f32 %v310
  %v439 = vcvt.s32.f32 %v311
  %v440 = vcvt.s32.f32 %v312
  %v441 = vcvt.s32.f32 %v313
  %v442 = vcvt.s32.f32 %v314
  %v443 = vcvt.s32.f32 %v315
  %v444 = vcvt.s32.f32 %v316
  %v445 = vcvt.s32.f32 %v317
  %v446 = vcvt.s32.f32 %v318
  %v447 = vcvt.s32.f32 %v319
  %v448 = vcvt.s32.f32 %v320
  %v449 = vcvt.s32.f32 %v321
  %v450 = vcvt.s32.f32 %v322
  %v451 = vcvt.s32.f32 %v323
  %v452 = vcvt.s32.f32 %v324
  %v453 = vcvt.s32.f32 %v325
  %v454 = vcvt.s32.f32 %v326
  %v455 = vcvt.s32.f32 %v327
  %v456 = vcvt.s32.f32 %v328
  %v457 = vcvt.s32.f32 %v329
  %v458 = vcvt.s32.f32 %v330
  %v459 = vcvt.s32.f32 %v331
  %v460 = vcvt.s32.f32 %v332
  %v461 = vcvt.s32.f32 %v333
  %v462 = vcvt.s32.f32 %v334
  %v463 = vcvt.s32.f32 %v335
  %v464 = vcvt.s32.f32 %v336
  %v465 = vcvt.s32.f32 %v337
  %v466 = vcvt.s32.f32 %v338
  %v467 = vcvt.s32.f32 %v339
  %v468 = vcvt.s32.f32 %v340
  %v469 = vcvt.s32.f32 %v341
  %v470 = vcvt.s32.f32 %v342
  %v471 = vcvt.s32.f32 %v343
  %v472 = vcvt.s32.f32 %v344
  %v473 = vcvt.s32.f32 %v345
  %v474 = vcvt.s32.f32 %v346
  %v475 = vcvt.s32.f32 %v347
  %v476 = vcvt.s32.f32 %v348
  %v477 = vcvt.s32.f32 %v349
  %v478 = vcvt.s32.f32 %v350
  %v479 = vcvt.s32.f32 %v351
  %v480 = vcvt.s32.f32 %v352
  %v481 = vcvt.s32.f32 %v353
  %v482 = vcvt.s32.f32 %v354
  %v483 = vcvt.s32.f32 %v355
  %v484 = vcvt.s32.f32 %v356
  %v485 = vcvt.s32.f32 %v357
  %v486 = vcvt.s32.f32 %v358
  %v487 = vcvt.s32.f32 %v359
  %v488 = vcvt.s32.f32 %v360
  %v489 = vcvt.s32.f32 %v361
  %v490 = vcvt.s32.f32 %v362
  %v491 = vcvt.s32.f32 %v363
  %v492 = vcvt.s32.f32 %v364
  %v493 = vcvt.s32.f32 %v365
  %v494 = vcvt.s32.f32 %v366
  %v495 = vcvt.s32.f32 %v367
  %v496 = vcvt.s32.f32 %v368
  %v497 = vpack.c.bf16 %v373, %v369
  %v498 = vpack.c.bf16 %v374, %v370
  %v499 = vpack.c.bf16 %v375, %v371
  %v500 = vpack.c.bf16 %v376, %v372
  %v501 = vpack.c.bf16 %v381, %v377
  %v502 = vpack.c.bf16 %v382, %v378
  %v503 = vpack.c.bf16 %v383, %v379
  %v504 = vpack.c.bf16 %v384, %v380
  %v505 = vpack.c.bf16 %v389, %v385
  %v506 = vpack.c.bf16 %v390, %v386
  %v507 = vpack.c.bf16 %v391, %v387
  %v508 = vpack.c.bf16 %v392, %v388
  %v509 = vpack.c.bf16 %v397, %v393
  %v510 = vpack.c.bf16 %v398, %v394
  %v511 = vpack.c.bf16 %v399, %v395
  %v512 = vpack.c.bf16 %v400, %v396
  %v513 = vpack.c.bf16 %v405, %v401
  %v514 = vpack.c.bf16 %v406, %v402
  %v515 = vpack.c.bf16 %v407, %v403
  %v516 = vpack.c.bf16 %v408, %v404
  %v517 = vpack.c.bf16 %v413, %v409
  %v518 = vpack.c.bf16 %v414, %v410
  %v519 = vpack.c.bf16 %v415, %v411
  %v520 = vpack.c.bf16 %v416, %v412
  %v521 = vpack.c.bf16 %v421, %v417
  %v522 = vpack.c.bf16 %v422, %v418
  %v523 = vpack.c.bf16 %v423, %v419
  %v524 = vpack.c.bf16 %v424, %v420
  %v525 = vpack.c.bf16 %v429, %v425
  %v526 = vpack.c.bf16 %v430, %v426
  %v527 = vpack.c.bf16 %v431, %v427
  %v528 = vpack.c.bf16 %v432, %v428
  %v529 = vpack.c.bf16 %v437, %v433
  %v530 = vpack.c.bf16 %v438, %v434
  %v531 = vpack.c.bf16 %v439, %v435
  %v532 = vpack.c.bf16 %v440, %v436
  %v533 = vpack.c.bf16 %v445, %v441
  %v534 = vpack.c.bf16 %v446, %v442
  %v535 = vpack.c.bf16 %v447, %v443
  %v536 = vpack.c.bf16 %v448, %v444
  %v537 = vpack.c.bf16 %v453, %v449
  %v538 = vpack.c.bf16 %v454, %v450
  %v539 = vpack.c.bf16 %v455, %v451
  %v540 = vpack.c.bf16 %v456, %v452
  %v541 = vpack.c.bf16 %v461, %v457
  %v542 = vpack.c.bf16 %v462, %v458
  %v543 = vpack.c.bf16 %v463, %v459
  %v544 = vpack.c.bf16 %v464, %v460
  %v545 = vpack.c.bf16 %v469, %v465
  %v546 = vpack.c.bf16 %v470, %v466
  %v547 = vpack.c.bf16 %v471, %v467
  %v548 = vpack.c.bf16 %v472, %v468
  %v549 = vpack.c.bf16 %v477, %v473
  %v550 = vpack.c.bf16 %v478, %v474
  %v551 = vpack.c.bf16 %v479, %v475
  %v552 = vpack.c.bf16 %v480, %v476
  %v553 = vpack.c.bf16 %v485, %v481
  %v554 = vpack.c.bf16 %v486, %v482
  %v555 = vpack.c.bf16 %v487, %v483
  %v556 = vpack.c.bf16 %v488, %v484
  %v557 = vpack.c.bf16 %v493, %v489
  %v558 = vpack.c.bf16 %v494, %v490
  %v559 = vpack.c.bf16 %v495, %v491
  %v560 = vpack.c.bf16 %v496, %v492
  %v561 = vld [vmem:[#allocation2] sm:$0xff]
  %v562 = vld [vmem:[#allocation2 + $0x8] sm:$0xff]
  %v563 = vld [vmem:[#allocation2 + $0x10] sm:$0xff]
  %v564 = vld [vmem:[#allocation2 + $0x18] sm:$0xff]
  %v565 = vld [vmem:[#allocation2 + $0x20] sm:$0xff]
  %v566 = vld [vmem:[#allocation2 + $0x28] sm:$0xff]
  %v567 = vld [vmem:[#allocation2 + $0x30] sm:$0xff]
  %v568 = vld [vmem:[#allocation2 + $0x38] sm:$0xff]
  %v569 = vld [vmem:[#allocation2 + $0x40] sm:$0xff]
  %v570 = vld [vmem:[#allocation2 + $0x48] sm:$0xff]
  %v571 = vld [vmem:[#allocation2 + $0x50] sm:$0xff]
  %v572 = vld [vmem:[#allocation2 + $0x58] sm:$0xff]
  %v573 = vld [vmem:[#allocation2 + $0x60] sm:$0xff]
  %v574 = vld [vmem:[#allocation2 + $0x68] sm:$0xff]
  %v575 = vld [vmem:[#allocation2 + $0x70] sm:$0xff]
  %v576 = vld [vmem:[#allocation2 + $0x78] sm:$0xff]
  %v577 = vld [vmem:[#allocation2 + $0x80] sm:$0xff]
  %v578 = vld [vmem:[#allocation2 + $0x88] sm:$0xff]
  %v579 = vld [vmem:[#allocation2 + $0x90] sm:$0xff]
  %v580 = vld [vmem:[#allocation2 + $0x98] sm:$0xff]
  %v581 = vld [vmem:[#allocation2 + $0xa0] sm:$0xff]
  %v582 = vld [vmem:[#allocation2 + $0xa8] sm:$0xff]
  %v583 = vld [vmem:[#allocation2 + $0xb0] sm:$0xff]
  %v584 = vld [vmem:[#allocation2 + $0xb8] sm:$0xff]
  %v585 = vld [vmem:[#allocation2 + $0xc0] sm:$0xff]
  %v586 = vld [vmem:[#allocation2 + $0xc8] sm:$0xff]
  %v587 = vld [vmem:[#allocation2 + $0xd0] sm:$0xff]
  %v588 = vld [vmem:[#allocation2 + $0xd8] sm:$0xff]
  %v589 = vld [vmem:[#allocation2 + $0xe0] sm:$0xff]
  %v590 = vld [vmem:[#allocation2 + $0xe8] sm:$0xff]
  %v591 = vld [vmem:[#allocation2 + $0xf0] sm:$0xff]
  %v592 = vld [vmem:[#allocation2 + $0xf8] sm:$0xff]
  %v593 = vld [vmem:[%s1] sm:$0xf]
  %v594 = vld [vmem:[%s1 + $0x4] sm:$0xf]
  %v595 = vld [vmem:[%s1 + $0x8] sm:$0xf]
  %v596 = vld [vmem:[%s1 + $0xc] sm:$0xf]
  %v597 = vld [vmem:[%s1 + $0x10] sm:$0xf]
  %v598 = vld [vmem:[%s1 + $0x14] sm:$0xf]
  %v599 = vld [vmem:[%s1 + $0x18] sm:$0xf]
  %v600 = vld [vmem:[%s1 + $0x1c] sm:$0xf]
  %v601 = vld [vmem:[%s1 + $0x20] sm:$0xf]
  %v602 = vld [vmem:[%s1 + $0x24] sm:$0xf]
  %v603 = vld [vmem:[%s1 + $0x28] sm:$0xf]
  %v604 = vld [vmem:[%s1 + $0x2c] sm:$0xf]
  %v605 = vld [vmem:[%s1 + $0x30] sm:$0xf]
  %v606 = vld [vmem:[%s1 + $0x34] sm:$0xf]
  %v607 = vld [vmem:[%s1 + $0x38] sm:$0xf]
  %v608 = vld [vmem:[%s1 + $0x3c] sm:$0xf]
  %v609 = vld [vmem:[%s1 + $0x40] sm:$0xf]
  %v610 = vld [vmem:[%s1 + $0x44] sm:$0xf]
  %v611 = vld [vmem:[%s1 + $0x48] sm:$0xf]
  %v612 = vld [vmem:[%s1 + $0x4c] sm:$0xf]
  %v613 = vld [vmem:[%s1 + $0x50] sm:$0xf]
  %v614 = vld [vmem:[%s1 + $0x54] sm:$0xf]
  %v615 = vld [vmem:[%s1 + $0x58] sm:$0xf]
  %v616 = vld [vmem:[%s1 + $0x5c] sm:$0xf]
  %v617 = vld [vmem:[%s1 + $0x60] sm:$0xf]
  %v618 = vld [vmem:[%s1 + $0x64] sm:$0xf]
  %v619 = vld [vmem:[%s1 + $0x68] sm:$0xf]
  %v620 = vld [vmem:[%s1 + $0x6c] sm:$0xf]
  %v621 = vld [vmem:[%s1 + $0x70] sm:$0xf]
  %v622 = vld [vmem:[%s1 + $0x74] sm:$0xf]
  %v623 = vld [vmem:[%s1 + $0x78] sm:$0xf]
  %v624 = vld [vmem:[%s1 + $0x7c] sm:$0xf]
  %v625 = vld [vmem:[%s1 + $0x80] sm:$0xf]
  %v626 = vld [vmem:[%s1 + $0x84] sm:$0xf]
  %v627 = vld [vmem:[%s1 + $0x88] sm:$0xf]
  %v628 = vld [vmem:[%s1 + $0x8c] sm:$0xf]
  %v629 = vld [vmem:[%s1 + $0x90] sm:$0xf]
  %v630 = vld [vmem:[%s1 + $0x94] sm:$0xf]
  %v631 = vld [vmem:[%s1 + $0x98] sm:$0xf]
  %v632 = vld [vmem:[%s1 + $0x9c] sm:$0xf]
  %v633 = vld [vmem:[%s1 + $0xa0] sm:$0xf]
  %v634 = vld [vmem:[%s1 + $0xa4] sm:$0xf]
  %v635 = vld [vmem:[%s1 + $0xa8] sm:$0xf]
  %v636 = vld [vmem:[%s1 + $0xac] sm:$0xf]
  %v637 = vld [vmem:[%s1 + $0xb0] sm:$0xf]
  %v638 = vld [vmem:[%s1 + $0xb4] sm:$0xf]
  %v639 = vld [vmem:[%s1 + $0xb8] sm:$0xf]
  %v640 = vld [vmem:[%s1 + $0xbc] sm:$0xf]
  %v641 = vld [vmem:[%s1 + $0xc0] sm:$0xf]
  %v642 = vld [vmem:[%s1 + $0xc4] sm:$0xf]
  %v643 = vld [vmem:[%s1 + $0xc8] sm:$0xf]
  %v644 = vld [vmem:[%s1 + $0xcc] sm:$0xf]
  %v645 = vld [vmem:[%s1 + $0xd0] sm:$0xf]
  %v646 = vld [vmem:[%s1 + $0xd4] sm:$0xf]
  %v647 = vld [vmem:[%s1 + $0xd8] sm:$0xf]
  %v648 = vld [vmem:[%s1 + $0xdc] sm:$0xf]
  %v649 = vld [vmem:[%s1 + $0xe0] sm:$0xf]
  %v650 = vld [vmem:[%s1 + $0xe4] sm:$0xf]
  %v651 = vld [vmem:[%s1 + $0xe8] sm:$0xf]
  %v652 = vld [vmem:[%s1 + $0xec] sm:$0xf]
  %v653 = vld [vmem:[%s1 + $0xf0] sm:$0xf]
  %v654 = vld [vmem:[%s1 + $0xf4] sm:$0xf]
  %v655 = vld [vmem:[%s1 + $0xf8] sm:$0xf]
  %v656 = vld [vmem:[%s1 + $0xfc] sm:$0xf]
  %v721 = vunpack.c.l.b16 %v593
  %v722 = vunpack.c.l.b16 %v594
  %v723 = vunpack.c.l.b16 %v595
  %v724 = vunpack.c.l.b16 %v596
  %v725 = vunpack.c.l.b16 %v597
  %v726 = vunpack.c.l.b16 %v598
  %v727 = vunpack.c.l.b16 %v599
  %v728 = vunpack.c.l.b16 %v600
  %v729 = vunpack.c.l.b16 %v601
  %v730 = vunpack.c.l.b16 %v602
  %v731 = vunpack.c.l.b16 %v603
  %v732 = vunpack.c.l.b16 %v604
  %v733 = vunpack.c.l.b16 %v605
  %v734 = vunpack.c.l.b16 %v606
  %v735 = vunpack.c.l.b16 %v607
  %v736 = vunpack.c.l.b16 %v608
  %v737 = vunpack.c.l.b16 %v609
  %v738 = vunpack.c.l.b16 %v610
  %v739 = vunpack.c.l.b16 %v611
  %v740 = vunpack.c.l.b16 %v612
  %v741 = vunpack.c.l.b16 %v613
  %v742 = vunpack.c.l.b16 %v614
  %v743 = vunpack.c.l.b16 %v615
  %v744 = vunpack.c.l.b16 %v616
  %v745 = vunpack.c.l.b16 %v617
  %v746 = vunpack.c.l.b16 %v618
  %v747 = vunpack.c.l.b16 %v619
  %v748 = vunpack.c.l.b16 %v620
  %v749 = vunpack.c.l.b16 %v621
  %v750 = vunpack.c.l.b16 %v622
  %v751 = vunpack.c.l.b16 %v623
  %v752 = vunpack.c.l.b16 %v624
  %v753 = vunpack.c.l.b16 %v625
  %v754 = vunpack.c.l.b16 %v626
  %v755 = vunpack.c.l.b16 %v627
  %v756 = vunpack.c.l.b16 %v628
  %v757 = vunpack.c.l.b16 %v629
  %v758 = vunpack.c.l.b16 %v630
  %v759 = vunpack.c.l.b16 %v631
  %v760 = vunpack.c.l.b16 %v632
  %v761 = vunpack.c.l.b16 %v633
  %v762 = vunpack.c.l.b16 %v634
  %v763 = vunpack.c.l.b16 %v635
  %v764 = vunpack.c.l.b16 %v636
  %v765 = vunpack.c.l.b16 %v637
  %v766 = vunpack.c.l.b16 %v638
  %v767 = vunpack.c.l.b16 %v639
  %v768 = vunpack.c.l.b16 %v640
  %v769 = vunpack.c.l.b16 %v641
  %v770 = vunpack.c.l.b16 %v642
  %v771 = vunpack.c.l.b16 %v643
  %v772 = vunpack.c.l.b16 %v644
  %v773 = vunpack.c.l.b16 %v645
  %v774 = vunpack.c.l.b16 %v646
  %v775 = vunpack.c.l.b16 %v647
  %v776 = vunpack.c.l.b16 %v648
  %v777 = vunpack.c.l.b16 %v649
  %v778 = vunpack.c.l.b16 %v650
  %v779 = vunpack.c.l.b16 %v651
  %v780 = vunpack.c.l.b16 %v652
  %v781 = vunpack.c.l.b16 %v653
  %v782 = vunpack.c.l.b16 %v654
  %v783 = vunpack.c.l.b16 %v655
  %v784 = vunpack.c.l.b16 %v656
  %v785 = vpack.c.b16 %v722, %v721
  %v786 = vpack.c.b16 %v724, %v723
  %v787 = vpack.c.b16 %v726, %v725
  %v788 = vpack.c.b16 %v728, %v727
  %v789 = vpack.c.b16 %v730, %v729
  %v790 = vpack.c.b16 %v732, %v731
  %v791 = vpack.c.b16 %v734, %v733
  %v792 = vpack.c.b16 %v736, %v735
  %v793 = vpack.c.b16 %v738, %v737
  %v794 = vpack.c.b16 %v740, %v739
  %v795 = vpack.c.b16 %v742, %v741
  %v796 = vpack.c.b16 %v744, %v743
  %v797 = vpack.c.b16 %v746, %v745
  %v798 = vpack.c.b16 %v748, %v747
  %v799 = vpack.c.b16 %v750, %v749
  %v800 = vpack.c.b16 %v752, %v751
  %v801 = vpack.c.b16 %v754, %v753
  %v802 = vpack.c.b16 %v756, %v755
  %v803 = vpack.c.b16 %v758, %v757
  %v804 = vpack.c.b16 %v760, %v759
  %v805 = vpack.c.b16 %v762, %v761
  %v806 = vpack.c.b16 %v764, %v763
  %v807 = vpack.c.b16 %v766, %v765
  %v808 = vpack.c.b16 %v768, %v767
  %v809 = vpack.c.b16 %v770, %v769
  %v810 = vpack.c.b16 %v772, %v771
  %v811 = vpack.c.b16 %v774, %v773
  %v812 = vpack.c.b16 %v776, %v775
  %v813 = vpack.c.b16 %v778, %v777
  %v814 = vpack.c.b16 %v780, %v779
  %v815 = vpack.c.b16 %v782, %v781
  %v816 = vpack.c.b16 %v784, %v783
  %849 = vmatprep.subr.bf16.mxu0 0
  %850 = vmatpush1.bf16.msra.mxu0 %v785
  %851 = vmatprep.subr.bf16.mxu0 0
  %852 = vmatpush1.bf16.msra.mxu0 %v786
  %853 = vmatprep.subr.bf16.mxu0 0
  %854 = vmatpush1.bf16.msra.mxu0 %v787
  %855 = vmatprep.subr.bf16.mxu0 0
  %856 = vmatpush1.bf16.msra.mxu0 %v788
  %857 = vmatprep.subr.bf16.mxu0 0
  %858 = vmatpush1.bf16.msra.mxu0 %v789
  %859 = vmatprep.subr.bf16.mxu0 0
  %860 = vmatpush1.bf16.msra.mxu0 %v790
  %861 = vmatprep.subr.bf16.mxu0 0
  %862 = vmatpush1.bf16.msra.mxu0 %v791
  %863 = vmatprep.subr.bf16.mxu0 0
  %864 = vmatpush1.bf16.msra.mxu0 %v792
  %865 = vmatprep.subr.bf16.mxu0 0
  %866 = vmatpush1.bf16.msra.mxu0 %v793
  %867 = vmatprep.subr.bf16.mxu0 0
  %868 = vmatpush1.bf16.msra.mxu0 %v794
  %869 = vmatprep.subr.bf16.mxu0 0
  %870 = vmatpush1.bf16.msra.mxu0 %v795
  %871 = vmatprep.subr.bf16.mxu0 0
  %872 = vmatpush1.bf16.msra.mxu0 %v796
  %873 = vmatprep.subr.bf16.mxu0 0
  %874 = vmatpush1.bf16.msra.mxu0 %v797
  %875 = vmatprep.subr.bf16.mxu0 0
  %876 = vmatpush1.bf16.msra.mxu0 %v798
  %877 = vmatprep.subr.bf16.mxu0 0
  %878 = vmatpush1.bf16.msra.mxu0 %v799
  %879 = vmatprep.subr.bf16.mxu0 0
  %880 = vmatpush1.bf16.msra.mxu0 %v800
  %881 = vmatprep.mubr.bf16.mxu0 %v498
  %882 = vmatmul.mubr.bf16.gmra.mrb[0].mxu0 %v497
  %v883 = vpop.f32.mrb[0].mxu0
  %v884 = vadd.f32 0.0, %v883
  %v885 = vpop.f32.mrb[0].mxu0
  %v886 = vpop.f32.mrb[0].mxu0
  %v887 = vadd.f32 0.0, %v886
  %v888 = vpop.f32.mrb[0].mxu0
  %889 = vmatprep.mubr.bf16.mxu0 %v502
  %890 = vmatmul.mubr.bf16.gmra.mrb[0].mxu0 %v501
  %v891 = vpop.f32.mrb[0].mxu0
  %v892 = vadd.f32 0.0, %v891
  %v893 = vpop.f32.mrb[0].mxu0
  %v894 = vpop.f32.mrb[0].mxu0
  %v895 = vadd.f32 0.0, %v894
  %v896 = vpop.f32.mrb[0].mxu0
  %897 = vmatprep.mubr.bf16.mxu0 %v506
  %898 = vmatmul.mubr.bf16.gmra.mrb[0].mxu0 %v505
  %v899 = vpop.f32.mrb[0].mxu0
  %v900 = vadd.f32 0.0, %v899
  %v901 = vpop.f32.mrb[0].mxu0
  %v902 = vpop.f32.mrb[0].mxu0
  %v903 = vadd.f32 0.0, %v902
  %v904 = vpop.f32.mrb[0].mxu0
  %905 = vmatprep.mubr.bf16.mxu0 %v510
  %906 = vmatmul.mubr.bf16.gmra.mrb[0].mxu0 %v509
  %v907 = vpop.f32.mrb[0].mxu0
  %v908 = vadd.f32 0.0, %v907
  %v909 = vpop.f32.mrb[0].mxu0
  %v910 = vpop.f32.mrb[0].mxu0
  %v911 = vadd.f32 0.0, %v910
  %v912 = vpop.f32.mrb[0].mxu0
  %913 = vmatprep.mubr.bf16.mxu0 %v514
  %914 = vmatmul.mubr.bf16.gmra.mrb[0].mxu0 %v513
  %v915 = vpop.f32.mrb[0].mxu0
  %v916 = vadd.f32 0.0, %v915
  %v917 = vpop.f32.mrb[0].mxu0
  %v918 = vpop.f32.mrb[0].mxu0
  %v919 = vadd.f32 0.0, %v918
  %v920 = vpop.f32.mrb[0].mxu0
  %921 = vmatprep.mubr.bf16.mxu0 %v518
  %922 = vmatmul.mubr.bf16.gmra.mrb[0].mxu0 %v517
  %v923 = vpop.f32.mrb[0].mxu0
  %v924 = vadd.f32 0.0, %v923
  %v925 = vpop.f32.mrb[0].mxu0
  %v926 = vpop.f32.mrb[0].mxu0
  %v927 = vadd.f32 0.0, %v926
  %v928 = vpop.f32.mrb[0].mxu0
  %929 = vmatprep.mubr.bf16.mxu0 %v522
  %930 = vmatmul.mubr.bf16.gmra.mrb[0].mxu0 %v521
  %v931 = vpop.f32.mrb[0].mxu0
  %v932 = vadd.f32 0.0, %v931
  %v933 = vpop.f32.mrb[0].mxu0
  %v934 = vpop.f32.mrb[0].mxu0
  %v935 = vadd.f32 0.0, %v934
  %v936 = vpop.f32.mrb[0].mxu0
  %937 = vmatprep.mubr.bf16.mxu0 %v526
  %938 = vmatmul.mubr.bf16.gmra.mrb[0].mxu0 %v525
  %v939 = vpop.f32.mrb[0].mxu0
  %v940 = vadd.f32 0.0, %v939
  %v941 = vpop.f32.mrb[0].mxu0
  %v942 = vpop.f32.mrb[0].mxu0
  %v943 = vadd.f32 0.0, %v942
  %v944 = vpop.f32.mrb[0].mxu0
  %945 = vmatprep.mubr.bf16.mxu0 %v530
  %946 = vmatmul.mubr.bf16.gmra.mrb[0].mxu0 %v529
  %v947 = vpop.f32.mrb[0].mxu0
  %v948 = vadd.f32 0.0, %v947
  %v949 = vpop.f32.mrb[0].mxu0
  %v950 = vpop.f32.mrb[0].mxu0
  %v951 = vadd.f32 0.0, %v950
  %v952 = vpop.f32.mrb[0].mxu0
  %953 = vmatprep.mubr.bf16.mxu0 %v534
  %954 = vmatmul.mubr.bf16.gmra.mrb[0].mxu0 %v533
  %v955 = vpop.f32.mrb[0].mxu0
  %v956 = vadd.f32 0.0, %v955
  %v957 = vpop.f32.mrb[0].mxu0
  %v958 = vpop.f32.mrb[0].mxu0
  %v959 = vadd.f32 0.0, %v958
  %v960 = vpop.f32.mrb[0].mxu0
  %961 = vmatprep.mubr.bf16.mxu0 %v538
  %962 = vmatmul.mubr.bf16.gmra.mrb[0].mxu0 %v537
  %v963 = vpop.f32.mrb[0].mxu0
  %v964 = vadd.f32 0.0, %v963
  %v965 = vpop.f32.mrb[0].mxu0
  %v966 = vpop.f32.mrb[0].mxu0
  %v967 = vadd.f32 0.0, %v966
  %v968 = vpop.f32.mrb[0].mxu0
  %969 = vmatprep.mubr.bf16.mxu0 %v542
  %970 = vmatmul.mubr.bf16.gmra.mrb[0].mxu0 %v541
  %v971 = vpop.f32.mrb[0].mxu0
  %v972 = vadd.f32 0.0, %v971
  %v973 = vpop.f32.mrb[0].mxu0
  %v974 = vpop.f32.mrb[0].mxu0
  %v975 = vadd.f32 0.0, %v974
  %v976 = vpop.f32.mrb[0].mxu0
  %977 = vmatprep.mubr.bf16.mxu0 %v546
  %978 = vmatmul.mubr.bf16.gmra.mrb[0].mxu0 %v545
  %v979 = vpop.f32.mrb[0].mxu0
  %v980 = vadd.f32 0.0, %v979
  %v981 = vpop.f32.mrb[0].mxu0
  %v982 = vpop.f32.mrb[0].mxu0
  %v983 = vadd.f32 0.0, %v982
  %v984 = vpop.f32.mrb[0].mxu0
  %985 = vmatprep.mubr.bf16.mxu0 %v550
  %986 = vmatmul.mubr.bf16.gmra.mrb[0].mxu0 %v549
  %v987 = vpop.f32.mrb[0].mxu0
  %v988 = vadd.f32 0.0, %v987
  %v989 = vpop.f32.mrb[0].mxu0
  %v990 = vpop.f32.mrb[0].mxu0
  %v991 = vadd.f32 0.0, %v990
  %v992 = vpop.f32.mrb[0].mxu0
  %993 = vmatprep.mubr.bf16.mxu0 %v554
  %994 = vmatmul.mubr.bf16.gmra.mrb[0].mxu0 %v553
  %v995 = vpop.f32.mrb[0].mxu0
  %v996 = vadd.f32 0.0, %v995
  %v997 = vpop.f32.mrb[0].mxu0
  %v998 = vpop.f32.mrb[0].mxu0
  %v999 = vadd.f32 0.0, %v998
  %v1000 = vpop.f32.mrb[0].mxu0
  %1001 = vmatprep.mubr.bf16.mxu0 %v558
  %1002 = vmatmul.mubr.bf16.gmra.mrb[0].mxu0 %v557
  %v1003 = vpop.f32.mrb[0].mxu0
  %v1004 = vadd.f32 0.0, %v1003
  %v1005 = vpop.f32.mrb[0].mxu0
  %v1006 = vpop.f32.mrb[0].mxu0
  %v1007 = vadd.f32 0.0, %v1006
  %v1008 = vpop.f32.mrb[0].mxu0
  %1009 = vdwg.mxu0
  %1010 = vmatprep.subr.bf16.mxu0 0
  %1011 = vmatpush1.bf16.msra.mxu0 %v801
  %1012 = vmatprep.subr.bf16.mxu0 0
  %1013 = vmatpush1.bf16.msra.mxu0 %v802
  %1014 = vmatprep.subr.bf16.mxu0 0
  %1015 = vmatpush1.bf16.msra.mxu0 %v803
  %1016 = vmatprep.subr.bf16.mxu0 0
  %1017 = vmatpush1.bf16.msra.mxu0 %v804
  %1018 = vmatprep.subr.bf16.mxu0 0
  %1019 = vmatpush1.bf16.msra.mxu0 %v805
  %1020 = vmatprep.subr.bf16.mxu0 0
  %1021 = vmatpush1.bf16.msra.mxu0 %v806
  %1022 = vmatprep.subr.bf16.mxu0 0
  %1023 = vmatpush1.bf16.msra.mxu0 %v807
  %1024 = vmatprep.subr.bf16.mxu0 0
  %1025 = vmatpush1.bf16.msra.mxu0 %v808
  %1026 = vmatprep.subr.bf16.mxu0 0
  %1027 = vmatpush1.bf16.msra.mxu0 %v809
  %1028 = vmatprep.subr.bf16.mxu0 0
  %1029 = vmatpush1.bf16.msra.mxu0 %v810
  %1030 = vmatprep.subr.bf16.mxu0 0
  %1031 = vmatpush1.bf16.msra.mxu0 %v811
  %1032 = vmatprep.subr.bf16.mxu0 0
  %1033 = vmatpush1.bf16.msra.mxu0 %v812
  %1034 = vmatprep.subr.bf16.mxu0 0
  %1035 = vmatpush1.bf16.msra.mxu0 %v813
  %1036 = vmatprep.subr.bf16.mxu0 0
  %1037 = vmatpush1.bf16.msra.mxu0 %v814
  %1038 = vmatprep.subr.bf16.mxu0 0
  %1039 = vmatpush1.bf16.msra.mxu0 %v815
  %1040 = vmatprep.subr.bf16.mxu0 0
  %1041 = vmatpush1.bf16.msra.mxu0 %v816
  %1042 = vmatprep.mubr.bf16.mxu0 %v500
  %1043 = vmatmul.mubr.bf16.gmra.mrb[0].mxu0 %v499
  %v1044 = vpop.f32.mrb[0].mxu0
  %v1045 = vadd.f32 %v884, %v1044
  %v1046 = vpop.f32.mrb[0].mxu0
  %v1047 = vpop.f32.mrb[0].mxu0
  %v1048 = vadd.f32 %v887, %v1047
  %v1049 = vpop.f32.mrb[0].mxu0
  %1050 = vmatprep.mubr.bf16.mxu0 %v504
  %1051 = vmatmul.mubr.bf16.gmra.mrb[0].mxu0 %v503
  %v1052 = vpop.f32.mrb[0].mxu0
  %v1053 = vadd.f32 %v892, %v1052
  %v1054 = vpop.f32.mrb[0].mxu0
  %v1055 = vpop.f32.mrb[0].mxu0
  %v1056 = vadd.f32 %v895, %v1055
  %v1057 = vpop.f32.mrb[0].mxu0
  %1058 = vmatprep.mubr.bf16.mxu0 %v508
  %1059 = vmatmul.mubr.bf16.gmra.mrb[0].mxu0 %v507
  %v1060 = vpop.f32.mrb[0].mxu0
  %v1061 = vadd.f32 %v900, %v1060
  %v1062 = vpop.f32.mrb[0].mxu0
  %v1063 = vpop.f32.mrb[0].mxu0
  %v1064 = vadd.f32 %v903, %v1063
  %v1065 = vpop.f32.mrb[0].mxu0
  %1066 = vmatprep.mubr.bf16.mxu0 %v512
  %1067 = vmatmul.mubr.bf16.gmra.mrb[0].mxu0 %v511
  %v1068 = vpop.f32.mrb[0].mxu0
  %v1069 = vadd.f32 %v908, %v1068
  %v1070 = vpop.f32.mrb[0].mxu0
  %v1071 = vpop.f32.mrb[0].mxu0
  %v1072 = vadd.f32 %v911, %v1071
  %v1073 = vpop.f32.mrb[0].mxu0
  %1074 = vmatprep.mubr.bf16.mxu0 %v516
  %1075 = vmatmul.mubr.bf16.gmra.mrb[0].mxu0 %v515
  %v1076 = vpop.f32.mrb[0].mxu0
  %v1077 = vadd.f32 %v916, %v1076
  %v1078 = vpop.f32.mrb[0].mxu0
  %v1079 = vpop.f32.mrb[0].mxu0
  %v1080 = vadd.f32 %v919, %v1079
  %v1081 = vpop.f32.mrb[0].mxu0
  %1082 = vmatprep.mubr.bf16.mxu0 %v520
  %1083 = vmatmul.mubr.bf16.gmra.mrb[0].mxu0 %v519
  %v1084 = vpop.f32.mrb[0].mxu0
  %v1085 = vadd.f32 %v924, %v1084
  %v1086 = vpop.f32.mrb[0].mxu0
  %v1087 = vpop.f32.mrb[0].mxu0
  %v1088 = vadd.f32 %v927, %v1087
  %v1089 = vpop.f32.mrb[0].mxu0
  %1090 = vmatprep.mubr.bf16.mxu0 %v524
  %1091 = vmatmul.mubr.bf16.gmra.mrb[0].mxu0 %v523
  %v1092 = vpop.f32.mrb[0].mxu0
  %v1093 = vadd.f32 %v932, %v1092
  %v1094 = vpop.f32.mrb[0].mxu0
  %v1095 = vpop.f32.mrb[0].mxu0
  %v1096 = vadd.f32 %v935, %v1095
  %v1097 = vpop.f32.mrb[0].mxu0
  %1098 = vmatprep.mubr.bf16.mxu0 %v528
  %1099 = vmatmul.mubr.bf16.gmra.mrb[0].mxu0 %v527
  %v1100 = vpop.f32.mrb[0].mxu0
  %v1101 = vadd.f32 %v940, %v1100
  %v1102 = vpop.f32.mrb[0].mxu0
  %v1103 = vpop.f32.mrb[0].mxu0
  %v1104 = vadd.f32 %v943, %v1103
  %v1105 = vpop.f32.mrb[0].mxu0
  %1106 = vmatprep.mubr.bf16.mxu0 %v532
  %1107 = vmatmul.mubr.bf16.gmra.mrb[0].mxu0 %v531
  %v1108 = vpop.f32.mrb[0].mxu0
  %v1109 = vadd.f32 %v948, %v1108
  %v1110 = vpop.f32.mrb[0].mxu0
  %v1111 = vpop.f32.mrb[0].mxu0
  %v1112 = vadd.f32 %v951, %v1111
  %v1113 = vpop.f32.mrb[0].mxu0
  %1114 = vmatprep.mubr.bf16.mxu0 %v536
  %1115 = vmatmul.mubr.bf16.gmra.mrb[0].mxu0 %v535
  %v1116 = vpop.f32.mrb[0].mxu0
  %v1117 = vadd.f32 %v956, %v1116
  %v1118 = vpop.f32.mrb[0].mxu0
  %v1119 = vpop.f32.mrb[0].mxu0
  %v1120 = vadd.f32 %v959, %v1119
  %v1121 = vpop.f32.mrb[0].mxu0
  %1122 = vmatprep.mubr.bf16.mxu0 %v540
  %1123 = vmatmul.mubr.bf16.gmra.mrb[0].mxu0 %v539
  %v1124 = vpop.f32.mrb[0].mxu0
  %v1125 = vadd.f32 %v964, %v1124
  %v1126 = vpop.f32.mrb[0].mxu0
  %v1127 = vpop.f32.mrb[0].mxu0
  %v1128 = vadd.f32 %v967, %v1127
  %v1129 = vpop.f32.mrb[0].mxu0
  %1130 = vmatprep.mubr.bf16.mxu0 %v544
  %1131 = vmatmul.mubr.bf16.gmra.mrb[0].mxu0 %v543
  %v1132 = vpop.f32.mrb[0].mxu0
  %v1133 = vadd.f32 %v972, %v1132
  %v1134 = vpop.f32.mrb[0].mxu0
  %v1135 = vpop.f32.mrb[0].mxu0
  %v1136 = vadd.f32 %v975, %v1135
  %v1137 = vpop.f32.mrb[0].mxu0
  %1138 = vmatprep.mubr.bf16.mxu0 %v548
  %1139 = vmatmul.mubr.bf16.gmra.mrb[0].mxu0 %v547
  %v1140 = vpop.f32.mrb[0].mxu0
  %v1141 = vadd.f32 %v980, %v1140
  %v1142 = vpop.f32.mrb[0].mxu0
  %v1143 = vpop.f32.mrb[0].mxu0
  %v1144 = vadd.f32 %v983, %v1143
  %v1145 = vpop.f32.mrb[0].mxu0
  %1146 = vmatprep.mubr.bf16.mxu0 %v552
  %1147 = vmatmul.mubr.bf16.gmra.mrb[0].mxu0 %v551
  %v1148 = vpop.f32.mrb[0].mxu0
  %v1149 = vadd.f32 %v988, %v1148
  %v1150 = vpop.f32.mrb[0].mxu0
  %v1151 = vpop.f32.mrb[0].mxu0
  %v1152 = vadd.f32 %v991, %v1151
  %v1153 = vpop.f32.mrb[0].mxu0
  %1154 = vmatprep.mubr.bf16.mxu0 %v556
  %1155 = vmatmul.mubr.bf16.gmra.mrb[0].mxu0 %v555
  %v1156 = vpop.f32.mrb[0].mxu0
  %v1157 = vadd.f32 %v996, %v1156
  %v1158 = vpop.f32.mrb[0].mxu0
  %v1159 = vpop.f32.mrb[0].mxu0
  %v1160 = vadd.f32 %v999, %v1159
  %v1161 = vpop.f32.mrb[0].mxu0
  %1162 = vmatprep.mubr.bf16.mxu0 %v560
  %1163 = vmatmul.mubr.bf16.gmra.mrb[0].mxu0 %v559
  %v1164 = vpop.f32.mrb[0].mxu0
  %v1165 = vadd.f32 %v1004, %v1164
  %v1166 = vpop.f32.mrb[0].mxu0
  %v1167 = vpop.f32.mrb[0].mxu0
  %v1168 = vadd.f32 %v1007, %v1167
  %v1169 = vpop.f32.mrb[0].mxu0
  %1170 = vdwg.mxu0
  %v1171 = vadd.f32 %v561, %v1045
  %v1172 = vadd.f32 %v562, %v1048
  %v1173 = vadd.f32 %v563, %v1053
  %v1174 = vadd.f32 %v564, %v1056
  %v1175 = vadd.f32 %v565, %v1061
  %v1176 = vadd.f32 %v566, %v1064
  %v1177 = vadd.f32 %v567, %v1069
  %v1178 = vadd.f32 %v568, %v1072
  %v1179 = vadd.f32 %v569, %v1077
  %v1180 = vadd.f32 %v570, %v1080
  %v1181 = vadd.f32 %v571, %v1085
  %v1182 = vadd.f32 %v572, %v1088
  %v1183 = vadd.f32 %v573, %v1093
  %v1184 = vadd.f32 %v574, %v1096
  %v1185 = vadd.f32 %v575, %v1101
  %v1186 = vadd.f32 %v576, %v1104
  %v1187 = vadd.f32 %v577, %v1109
  %v1188 = vadd.f32 %v578, %v1112
  %v1189 = vadd.f32 %v579, %v1117
  %v1190 = vadd.f32 %v580, %v1120
  %v1191 = vadd.f32 %v581, %v1125
  %v1192 = vadd.f32 %v582, %v1128
  %v1193 = vadd.f32 %v583, %v1133
  %v1194 = vadd.f32 %v584, %v1136
  %v1195 = vadd.f32 %v585, %v1141
  %v1196 = vadd.f32 %v586, %v1144
  %v1197 = vadd.f32 %v587, %v1149
  %v1198 = vadd.f32 %v588, %v1152
  %v1199 = vadd.f32 %v589, %v1157
  %v1200 = vadd.f32 %v590, %v1160
  %v1201 = vadd.f32 %v591, %v1165
  %v1202 = vadd.f32 %v592, %v1168
  %1203 = vst [vmem:[#allocation2] sm:$0xff] %v1171
  %1204 = vst [vmem:[#allocation2 + $0x8] sm:$0xff] %v1172
  %1205 = vst [vmem:[#allocation2 + $0x10] sm:$0xff] %v1173
  %1206 = vst [vmem:[#allocation2 + $0x18] sm:$0xff] %v1174
  %1207 = vst [vmem:[#allocation2 + $0x20] sm:$0xff] %v1175
  %1208 = vst [vmem:[#allocation2 + $0x28] sm:$0xff] %v1176
  %1209 = vst [vmem:[#allocation2 + $0x30] sm:$0xff] %v1177
  %1210 = vst [vmem:[#allocation2 + $0x38] sm:$0xff] %v1178
  %1211 = vst [vmem:[#allocation2 + $0x40] sm:$0xff] %v1179
  %1212 = vst [vmem:[#allocation2 + $0x48] sm:$0xff] %v1180
  %1213 = vst [vmem:[#allocation2 + $0x50] sm:$0xff] %v1181
  %1214 = vst [vmem:[#allocation2 + $0x58] sm:$0xff] %v1182
  %1215 = vst [vmem:[#allocation2 + $0x60] sm:$0xff] %v1183
  %1216 = vst [vmem:[#allocation2 + $0x68] sm:$0xff] %v1184
  %1217 = vst [vmem:[#allocation2 + $0x70] sm:$0xff] %v1185
  %1218 = vst [vmem:[#allocation2 + $0x78] sm:$0xff] %v1186
  %1219 = vst [vmem:[#allocation2 + $0x80] sm:$0xff] %v1187
  %1220 = vst [vmem:[#allocation2 + $0x88] sm:$0xff] %v1188
  %1221 = vst [vmem:[#allocation2 + $0x90] sm:$0xff] %v1189
  %1222 = vst [vmem:[#allocation2 + $0x98] sm:$0xff] %v1190
  %1223 = vst [vmem:[#allocation2 + $0xa0] sm:$0xff] %v1191
  %1224 = vst [vmem:[#allocation2 + $0xa8] sm:$0xff] %v1192
  %1225 = vst [vmem:[#allocation2 + $0xb0] sm:$0xff] %v1193
  %1226 = vst [vmem:[#allocation2 + $0xb8] sm:$0xff] %v1194
  %1227 = vst [vmem:[#allocation2 + $0xc0] sm:$0xff] %v1195
  %1228 = vst [vmem:[#allocation2 + $0xc8] sm:$0xff] %v1196
  %1229 = vst [vmem:[#allocation2 + $0xd0] sm:$0xff] %v1197
  %1230 = vst [vmem:[#allocation2 + $0xd8] sm:$0xff] %v1198
  %1231 = vst [vmem:[#allocation2 + $0xe0] sm:$0xff] %v1199
  %1232 = vst [vmem:[#allocation2 + $0xe8] sm:$0xff] %v1200
  %1233 = vst [vmem:[#allocation2 + $0xf0] sm:$0xff] %v1201
  %1234 = vst [vmem:[#allocation2 + $0xf8] sm:$0xff] %v1202
  // Predicated region
  $region30: #{gin_conv.1} parent=0 // pred_check
    %p1235 = pneg %p24
  $region31: #{gin_conv.1} parent=0 // pred_check_branch
    %1237 = sbr.rel (%p1235) target = $region33
  $region32: #{gin_conv.1} parent=0 // pred_region
    %v1238 = vld [vmem:[#allocation2] sm:$0xff]
    %v1239 = vld [vmem:[#allocation2 + $0x8] sm:$0xff]
    %v1240 = vld [vmem:[#allocation2 + $0x10] sm:$0xff]
    %v1241 = vld [vmem:[#allocation2 + $0x18] sm:$0xff]
    %v1242 = vld [vmem:[#allocation2 + $0x20] sm:$0xff]
    %v1243 = vld [vmem:[#allocation2 + $0x28] sm:$0xff]
    %v1244 = vld [vmem:[#allocation2 + $0x30] sm:$0xff]
    %v1245 = vld [vmem:[#allocation2 + $0x38] sm:$0xff]
    %v1246 = vld [vmem:[#allocation2 + $0x40] sm:$0xff]
    %v1247 = vld [vmem:[#allocation2 + $0x48] sm:$0xff]
    %v1248 = vld [vmem:[#allocation2 + $0x50] sm:$0xff]
    %v1249 = vld [vmem:[#allocation2 + $0x58] sm:$0xff]
    %v1250 = vld [vmem:[#allocation2 + $0x60] sm:$0xff]
    %v1251 = vld [vmem:[#allocation2 + $0x68] sm:$0xff]
    %v1252 = vld [vmem:[#allocation2 + $0x70] sm:$0xff]
    %v1253 = vld [vmem:[#allocation2 + $0x78] sm:$0xff]
    %v1254 = vld [vmem:[#allocation2 + $0x80] sm:$0xff]
    %v1255 = vld [vmem:[#allocation2 + $0x88] sm:$0xff]
    %v1256 = vld [vmem:[#allocation2 + $0x90] sm:$0xff]
    %v1257 = vld [vmem:[#allocation2 + $0x98] sm:$0xff]
    %v1258 = vld [vmem:[#allocation2 + $0xa0] sm:$0xff]
    %v1259 = vld [vmem:[#allocation2 + $0xa8] sm:$0xff]
    %v1260 = vld [vmem:[#allocation2 + $0xb0] sm:$0xff]
    %v1261 = vld [vmem:[#allocation2 + $0xb8] sm:$0xff]
    %v1262 = vld [vmem:[#allocation2 + $0xc0] sm:$0xff]
    %v1263 = vld [vmem:[#allocation2 + $0xc8] sm:$0xff]
    %v1264 = vld [vmem:[#allocation2 + $0xd0] sm:$0xff]
    %v1265 = vld [vmem:[#allocation2 + $0xd8] sm:$0xff]
    %v1266 = vld [vmem:[#allocation2 + $0xe0] sm:$0xff]
    %v1267 = vld [vmem:[#allocation2 + $0xe8] sm:$0xff]
    %v1268 = vld [vmem:[#allocation2 + $0xf0] sm:$0xff]
    %v1269 = vld [vmem:[#allocation2 + $0xf8] sm:$0xff]
    %v1270 = vpack.c.bf16 %v1239, %v1238
    %v1271 = vpack.c.bf16 %v1241, %v1240
    %v1272 = vpack.c.bf16 %v1243, %v1242
    %v1273 = vpack.c.bf16 %v1245, %v1244
    %v1274 = vpack.c.bf16 %v1247, %v1246
    %v1275 = vpack.c.bf16 %v1249, %v1248
    %v1276 = vpack.c.bf16 %v1251, %v1250
    %v1277 = vpack.c.bf16 %v1253, %v1252
    %v1278 = vpack.c.bf16 %v1255, %v1254
    %v1279 = vpack.c.bf16 %v1257, %v1256
    %v1280 = vpack.c.bf16 %v1259, %v1258
    %v1281 = vpack.c.bf16 %v1261, %v1260
    %v1282 = vpack.c.bf16 %v1263, %v1262
    %v1283 = vpack.c.bf16 %v1265, %v1264
    %v1284 = vpack.c.bf16 %v1267, %v1266
    %v1285 = vpack.c.bf16 %v1269, %v1268
    %v1286 = vld [vmem:[%s2] sm:$0xf]
    %v1287 = vld [vmem:[%s2 + $0x4] sm:$0xf]
    %v1288 = vld [vmem:[%s2 + $0x8] sm:$0xf]
    %v1289 = vld [vmem:[%s2 + $0xc] sm:$0xf]
    %v1290 = vld [vmem:[%s2 + $0x10] sm:$0xf]
    %v1291 = vld [vmem:[%s2 + $0x14] sm:$0xf]
    %v1292 = vld [vmem:[%s2 + $0x18] sm:$0xf]
    %v1293 = vld [vmem:[%s2 + $0x1c] sm:$0xf]
    %v1294 = vld [vmem:[%s2 + $0x20] sm:$0xf]
    %v1295 = vld [vmem:[%s2 + $0x24] sm:$0xf]
    %v1296 = vld [vmem:[%s2 + $0x28] sm:$0xf]
    %v1297 = vld [vmem:[%s2 + $0x2c] sm:$0xf]
    %v1298 = vld [vmem:[%s2 + $0x30] sm:$0xf]
    %v1299 = vld [vmem:[%s2 + $0x34] sm:$0xf]
    %v1300 = vld [vmem:[%s2 + $0x38] sm:$0xf]
    %v1301 = vld [vmem:[%s2 + $0x3c] sm:$0xf]
    %v1302 = vld [vmem:[%s3] sm:$0x1]
    %v1304 = vlaneseq
    %v1305 = vshrl.u32 %v1304, 7
    %v1306 = vsub.s32 0, %v1305
    %v1307 = vrot.slane %v1302, %v1306
    %v1325 = vunpack.c.l.b16 %v1286
    %v1326 = vunpack.c.l.b16 %v1287
    %v1327 = vunpack.c.l.b16 %v1288
    %v1328 = vunpack.c.l.b16 %v1289
    %v1329 = vunpack.c.l.b16 %v1290
    %v1330 = vunpack.c.l.b16 %v1291
    %v1331 = vunpack.c.l.b16 %v1292
    %v1332 = vunpack.c.l.b16 %v1293
    %v1333 = vunpack.c.l.b16 %v1294
    %v1334 = vunpack.c.l.b16 %v1295
    %v1335 = vunpack.c.l.b16 %v1296
    %v1336 = vunpack.c.l.b16 %v1297
    %v1337 = vunpack.c.l.b16 %v1298
    %v1338 = vunpack.c.l.b16 %v1299
    %v1339 = vunpack.c.l.b16 %v1300
    %v1340 = vunpack.c.l.b16 %v1301
    %v1341 = vpack.c.b16 %v1326, %v1325
    %v1342 = vpack.c.b16 %v1328, %v1327
    %v1343 = vpack.c.b16 %v1330, %v1329
    %v1344 = vpack.c.b16 %v1332, %v1331
    %v1345 = vpack.c.b16 %v1334, %v1333
    %v1346 = vpack.c.b16 %v1336, %v1335
    %v1347 = vpack.c.b16 %v1338, %v1337
    %v1348 = vpack.c.b16 %v1340, %v1339
    %1357 = vmatprep.subr.bf16.mxu0 0
    %1358 = vmatpush1.bf16.msra.mxu0 %v1341
    %1359 = vmatprep.subr.bf16.mxu0 0
    %1360 = vmatpush1.bf16.msra.mxu0 %v1342
    %1361 = vmatprep.subr.bf16.mxu0 0
    %1362 = vmatpush1.bf16.msra.mxu0 %v1343
    %1363 = vmatprep.subr.bf16.mxu0 0
    %1364 = vmatpush1.bf16.msra.mxu0 %v1344
    %1365 = vmatprep.subr.bf16.mxu0 0
    %1366 = vmatpush1.bf16.msra.mxu0 %v1345
    %1367 = vmatprep.subr.bf16.mxu0 0
    %1368 = vmatpush1.bf16.msra.mxu0 %v1346
    %1369 = vmatprep.subr.bf16.mxu0 0
    %1370 = vmatpush1.bf16.msra.mxu0 %v1347
    %1371 = vmatprep.subr.bf16.mxu0 0
    %1372 = vmatpush1.bf16.msra.mxu0 %v1348
    %1373 = vmatprep.subr.bf16.mxu0 0
    %1374 = vmatpush1.bf16.msra.mxu0 0
    %1375 = vmatprep.subr.bf16.mxu0 0
    %1376 = vmatpush1.bf16.msra.mxu0 0
    %1377 = vmatprep.subr.bf16.mxu0 0
    %1378 = vmatpush1.bf16.msra.mxu0 0
    %1379 = vmatprep.subr.bf16.mxu0 0
    %1380 = vmatpush1.bf16.msra.mxu0 0
    %1381 = vmatprep.subr.bf16.mxu0 0
    %1382 = vmatpush1.bf16.msra.mxu0 0
    %1383 = vmatprep.subr.bf16.mxu0 0
    %1384 = vmatpush1.bf16.msra.mxu0 0
    %1385 = vmatprep.subr.bf16.mxu0 0
    %1386 = vmatpush1.bf16.msra.mxu0 0
    %1387 = vmatprep.subr.bf16.mxu0 0
    %1388 = vmatpush1.bf16.msra.mxu0 0
    %1389 = vmatprep.mubr.bf16.mxu0 0
    %1390 = vmatmul.mubr.bf16.gmra.mrb[0].mxu0 %v1270
    %v1391 = vpop.f32.mrb[0].mxu0
    %v1392 = vadd.f32 %v1307, %v1391
    %v1393 = vpop.f32.mrb[0].mxu0
    %v1394 = vpop.f32.mrb[0].mxu0
    %v1395 = vadd.f32 %v1307, %v1394
    %v1396 = vpop.f32.mrb[0].mxu0
    %1397 = vmatprep.mubr.bf16.mxu0 0
    %1398 = vmatmul.mubr.bf16.gmra.mrb[0].mxu0 %v1271
    %v1399 = vpop.f32.mrb[0].mxu0
    %v1400 = vadd.f32 %v1307, %v1399
    %v1401 = vpop.f32.mrb[0].mxu0
    %v1402 = vpop.f32.mrb[0].mxu0
    %v1403 = vadd.f32 %v1307, %v1402
    %v1404 = vpop.f32.mrb[0].mxu0
    %1405 = vmatprep.mubr.bf16.mxu0 0
    %1406 = vmatmul.mubr.bf16.gmra.mrb[0].mxu0 %v1272
    %v1407 = vpop.f32.mrb[0].mxu0
    %v1408 = vadd.f32 %v1307, %v1407
    %v1409 = vpop.f32.mrb[0].mxu0
    %v1410 = vpop.f32.mrb[0].mxu0
    %v1411 = vadd.f32 %v1307, %v1410
    %v1412 = vpop.f32.mrb[0].mxu0
    %1413 = vmatprep.mubr.bf16.mxu0 0
    %1414 = vmatmul.mubr.bf16.gmra.mrb[0].mxu0 %v1273
    %v1415 = vpop.f32.mrb[0].mxu0
    %v1416 = vadd.f32 %v1307, %v1415
    %v1417 = vpop.f32.mrb[0].mxu0
    %v1418 = vpop.f32.mrb[0].mxu0
    %v1419 = vadd.f32 %v1307, %v1418
    %v1420 = vpop.f32.mrb[0].mxu0
    %1421 = vmatprep.mubr.bf16.mxu0 0
    %1422 = vmatmul.mubr.bf16.gmra.mrb[0].mxu0 %v1274
    %v1423 = vpop.f32.mrb[0].mxu0
    %v1424 = vadd.f32 %v1307, %v1423
    %v1425 = vpop.f32.mrb[0].mxu0
    %v1426 = vpop.f32.mrb[0].mxu0
    %v1427 = vadd.f32 %v1307, %v1426
    %v1428 = vpop.f32.mrb[0].mxu0
    %1429 = vmatprep.mubr.bf16.mxu0 0
    %1430 = vmatmul.mubr.bf16.gmra.mrb[0].mxu0 %v1275
    %v1431 = vpop.f32.mrb[0].mxu0
    %v1432 = vadd.f32 %v1307, %v1431
    %v1433 = vpop.f32.mrb[0].mxu0
    %v1434 = vpop.f32.mrb[0].mxu0
    %v1435 = vadd.f32 %v1307, %v1434
    %v1436 = vpop.f32.mrb[0].mxu0
    %1437 = vmatprep.mubr.bf16.mxu0 0
    %1438 = vmatmul.mubr.bf16.gmra.mrb[0].mxu0 %v1276
    %v1439 = vpop.f32.mrb[0].mxu0
    %v1440 = vadd.f32 %v1307, %v1439
    %v1441 = vpop.f32.mrb[0].mxu0
    %v1442 = vpop.f32.mrb[0].mxu0
    %v1443 = vadd.f32 %v1307, %v1442
    %v1444 = vpop.f32.mrb[0].mxu0
    %1445 = vmatprep.mubr.bf16.mxu0 0
    %1446 = vmatmul.mubr.bf16.gmra.mrb[0].mxu0 %v1277
    %v1447 = vpop.f32.mrb[0].mxu0
    %v1448 = vadd.f32 %v1307, %v1447
    %v1449 = vpop.f32.mrb[0].mxu0
    %v1450 = vpop.f32.mrb[0].mxu0
    %v1451 = vadd.f32 %v1307, %v1450
    %v1452 = vpop.f32.mrb[0].mxu0
    %1453 = vmatprep.mubr.bf16.mxu0 0
    %1454 = vmatmul.mubr.bf16.gmra.mrb[0].mxu0 %v1278
    %v1455 = vpop.f32.mrb[0].mxu0
    %v1456 = vadd.f32 %v1307, %v1455
    %v1457 = vpop.f32.mrb[0].mxu0
    %v1458 = vpop.f32.mrb[0].mxu0
    %v1459 = vadd.f32 %v1307, %v1458
    %v1460 = vpop.f32.mrb[0].mxu0
    %1461 = vmatprep.mubr.bf16.mxu0 0
    %1462 = vmatmul.mubr.bf16.gmra.mrb[0].mxu0 %v1279
    %v1463 = vpop.f32.mrb[0].mxu0
    %v1464 = vadd.f32 %v1307, %v1463
    %v1465 = vpop.f32.mrb[0].mxu0
    %v1466 = vpop.f32.mrb[0].mxu0
    %v1467 = vadd.f32 %v1307, %v1466
    %v1468 = vpop.f32.mrb[0].mxu0
    %1469 = vmatprep.mubr.bf16.mxu0 0
    %1470 = vmatmul.mubr.bf16.gmra.mrb[0].mxu0 %v1280
    %v1471 = vpop.f32.mrb[0].mxu0
    %v1472 = vadd.f32 %v1307, %v1471
    %v1473 = vpop.f32.mrb[0].mxu0
    %v1474 = vpop.f32.mrb[0].mxu0
    %v1475 = vadd.f32 %v1307, %v1474
    %v1476 = vpop.f32.mrb[0].mxu0
    %1477 = vmatprep.mubr.bf16.mxu0 0
    %1478 = vmatmul.mubr.bf16.gmra.mrb[0].mxu0 %v1281
    %v1479 = vpop.f32.mrb[0].mxu0
    %v1480 = vadd.f32 %v1307, %v1479
    %v1481 = vpop.f32.mrb[0].mxu0
    %v1482 = vpop.f32.mrb[0].mxu0
    %v1483 = vadd.f32 %v1307, %v1482
    %v1484 = vpop.f32.mrb[0].mxu0
    %1485 = vmatprep.mubr.bf16.mxu0 0
    %1486 = vmatmul.mubr.bf16.gmra.mrb[0].mxu0 %v1282
    %v1487 = vpop.f32.mrb[0].mxu0
    %v1488 = vadd.f32 %v1307, %v1487
    %v1489 = vpop.f32.mrb[0].mxu0
    %v1490 = vpop.f32.mrb[0].mxu0
    %v1491 = vadd.f32 %v1307, %v1490
    %v1492 = vpop.f32.mrb[0].mxu0
    %1493 = vmatprep.mubr.bf16.mxu0 0
    %1494 = vmatmul.mubr.bf16.gmra.mrb[0].mxu0 %v1283
    %v1495 = vpop.f32.mrb[0].mxu0
    %v1496 = vadd.f32 %v1307, %v1495
    %v1497 = vpop.f32.mrb[0].mxu0
    %v1498 = vpop.f32.mrb[0].mxu0
    %v1499 = vadd.f32 %v1307, %v1498
    %v1500 = vpop.f32.mrb[0].mxu0
    %1501 = vmatprep.mubr.bf16.mxu0 0
    %1502 = vmatmul.mubr.bf16.gmra.mrb[0].mxu0 %v1284
    %v1503 = vpop.f32.mrb[0].mxu0
    %v1504 = vadd.f32 %v1307, %v1503
    %v1505 = vpop.f32.mrb[0].mxu0
    %v1506 = vpop.f32.mrb[0].mxu0
    %v1507 = vadd.f32 %v1307, %v1506
    %v1508 = vpop.f32.mrb[0].mxu0
    %1509 = vmatprep.mubr.bf16.mxu0 0
    %1510 = vmatmul.mubr.bf16.gmra.mrb[0].mxu0 %v1285
    %v1511 = vpop.f32.mrb[0].mxu0
    %v1512 = vadd.f32 %v1307, %v1511
    %v1513 = vpop.f32.mrb[0].mxu0
    %v1514 = vpop.f32.mrb[0].mxu0
    %v1515 = vadd.f32 %v1307, %v1514
    %v1516 = vpop.f32.mrb[0].mxu0
    %1517 = vdwg.mxu0
    %v1518 = vmax.f32 %v1392, 0.0
    %v1519 = vmax.f32 %v1395, 0.0
    %v1520 = vmax.f32 %v1400, 0.0
    %v1521 = vmax.f32 %v1403, 0.0
    %v1522 = vmax.f32 %v1408, 0.0
    %v1523 = vmax.f32 %v1411, 0.0
    %v1524 = vmax.f32 %v1416, 0.0
    %v1525 = vmax.f32 %v1419, 0.0
    %v1526 = vmax.f32 %v1424, 0.0
    %v1527 = vmax.f32 %v1427, 0.0
    %v1528 = vmax.f32 %v1432, 0.0
    %v1529 = vmax.f32 %v1435, 0.0
    %v1530 = vmax.f32 %v1440, 0.0
    %v1531 = vmax.f32 %v1443, 0.0
    %v1532 = vmax.f32 %v1448, 0.0
    %v1533 = vmax.f32 %v1451, 0.0
    %v1534 = vmax.f32 %v1456, 0.0
    %v1535 = vmax.f32 %v1459, 0.0
    %v1536 = vmax.f32 %v1464, 0.0
    %v1537 = vmax.f32 %v1467, 0.0
    %v1538 = vmax.f32 %v1472, 0.0
    %v1539 = vmax.f32 %v1475, 0.0
    %v1540 = vmax.f32 %v1480, 0.0
    %v1541 = vmax.f32 %v1483, 0.0
    %v1542 = vmax.f32 %v1488, 0.0
    %v1543 = vmax.f32 %v1491, 0.0
    %v1544 = vmax.f32 %v1496, 0.0
    %v1545 = vmax.f32 %v1499, 0.0
    %v1546 = vmax.f32 %v1504, 0.0
    %v1547 = vmax.f32 %v1507, 0.0
    %v1548 = vmax.f32 %v1512, 0.0
    %v1549 = vmax.f32 %v1515, 0.0
    %v1550 = vpack.c.bf16 %v1519, %v1518
    %v1551 = vpack.c.bf16 %v1521, %v1520
    %v1552 = vpack.c.bf16 %v1523, %v1522
    %v1553 = vpack.c.bf16 %v1525, %v1524
    %v1554 = vpack.c.bf16 %v1527, %v1526
    %v1555 = vpack.c.bf16 %v1529, %v1528
    %v1556 = vpack.c.bf16 %v1531, %v1530
    %v1557 = vpack.c.bf16 %v1533, %v1532
    %v1558 = vpack.c.bf16 %v1535, %v1534
    %v1559 = vpack.c.bf16 %v1537, %v1536
    %v1560 = vpack.c.bf16 %v1539, %v1538
    %v1561 = vpack.c.bf16 %v1541, %v1540
    %v1562 = vpack.c.bf16 %v1543, %v1542
    %v1563 = vpack.c.bf16 %v1545, %v1544
    %v1564 = vpack.c.bf16 %v1547, %v1546
    %v1565 = vpack.c.bf16 %v1549, %v1548
    %v1566 = vld [vmem:[%s4] sm:$0xf]
    %v1567 = vld [vmem:[%s4 + $0x4] sm:$0xf]
    %v1568 = vld [vmem:[%s4 + $0x8] sm:$0xf]
    %v1569 = vld [vmem:[%s4 + $0xc] sm:$0xf]
    %v1570 = vld [vmem:[%s4 + $0x10] sm:$0xf]
    %v1571 = vld [vmem:[%s4 + $0x14] sm:$0xf]
    %v1572 = vld [vmem:[%s4 + $0x18] sm:$0xf]
    %v1573 = vld [vmem:[%s4 + $0x1c] sm:$0xf]
    %v1574 = vld [vmem:[%s4 + $0x20] sm:$0xf]
    %v1575 = vld [vmem:[%s4 + $0x24] sm:$0xf]
    %v1576 = vld [vmem:[%s4 + $0x28] sm:$0xf]
    %v1577 = vld [vmem:[%s4 + $0x2c] sm:$0xf]
    %v1578 = vld [vmem:[%s4 + $0x30] sm:$0xf]
    %v1579 = vld [vmem:[%s4 + $0x34] sm:$0xf]
    %v1580 = vld [vmem:[%s4 + $0x38] sm:$0xf]
    %v1581 = vld [vmem:[%s4 + $0x3c] sm:$0xf]
    %v1582 = vld [vmem:[%s5] sm:$0x1]
    %v1584 = vlaneseq
    %v1585 = vshrl.u32 %v1584, 7
    %v1586 = vsub.s32 0, %v1585
    %v1587 = vrot.slane %v1582, %v1586
    %v1605 = vunpack.c.l.b16 %v1566
    %v1606 = vunpack.c.l.b16 %v1567
    %v1607 = vunpack.c.l.b16 %v1568
    %v1608 = vunpack.c.l.b16 %v1569
    %v1609 = vunpack.c.l.b16 %v1570
    %v1610 = vunpack.c.l.b16 %v1571
    %v1611 = vunpack.c.l.b16 %v1572
    %v1612 = vunpack.c.l.b16 %v1573
    %v1613 = vunpack.c.l.b16 %v1574
    %v1614 = vunpack.c.l.b16 %v1575
    %v1615 = vunpack.c.l.b16 %v1576
    %v1616 = vunpack.c.l.b16 %v1577
    %v1617 = vunpack.c.l.b16 %v1578
    %v1618 = vunpack.c.l.b16 %v1579
    %v1619 = vunpack.c.l.b16 %v1580
    %v1620 = vunpack.c.l.b16 %v1581
    %v1621 = vpack.c.b16 %v1606, %v1605
    %v1622 = vpack.c.b16 %v1608, %v1607
    %v1623 = vpack.c.b16 %v1610, %v1609
    %v1624 = vpack.c.b16 %v1612, %v1611
    %v1625 = vpack.c.b16 %v1614, %v1613
    %v1626 = vpack.c.b16 %v1616, %v1615
    %v1627 = vpack.c.b16 %v1618, %v1617
    %v1628 = vpack.c.b16 %v1620, %v1619
    %1637 = vmatprep.subr.bf16.mxu0 0
    %1638 = vmatpush1.bf16.msra.mxu0 %v1621
    %1639 = vmatprep.subr.bf16.mxu0 0
    %1640 = vmatpush1.bf16.msra.mxu0 %v1622
    %1641 = vmatprep.subr.bf16.mxu0 0
    %1642 = vmatpush1.bf16.msra.mxu0 %v1623
    %1643 = vmatprep.subr.bf16.mxu0 0
    %1644 = vmatpush1.bf16.msra.mxu0 %v1624
    %1645 = vmatprep.subr.bf16.mxu0 0
    %1646 = vmatpush1.bf16.msra.mxu0 %v1625
    %1647 = vmatprep.subr.bf16.mxu0 0
    %1648 = vmatpush1.bf16.msra.mxu0 %v1626
    %1649 = vmatprep.subr.bf16.mxu0 0
    %1650 = vmatpush1.bf16.msra.mxu0 %v1627
    %1651 = vmatprep.subr.bf16.mxu0 0
    %1652 = vmatpush1.bf16.msra.mxu0 %v1628
    %1653 = vmatprep.subr.bf16.mxu0 0
    %1654 = vmatpush1.bf16.msra.mxu0 0
    %1655 = vmatprep.subr.bf16.mxu0 0
    %1656 = vmatpush1.bf16.msra.mxu0 0
    %1657 = vmatprep.subr.bf16.mxu0 0
    %1658 = vmatpush1.bf16.msra.mxu0 0
    %1659 = vmatprep.subr.bf16.mxu0 0
    %1660 = vmatpush1.bf16.msra.mxu0 0
    %1661 = vmatprep.subr.bf16.mxu0 0
    %1662 = vmatpush1.bf16.msra.mxu0 0
    %1663 = vmatprep.subr.bf16.mxu0 0
    %1664 = vmatpush1.bf16.msra.mxu0 0
    %1665 = vmatprep.subr.bf16.mxu0 0
    %1666 = vmatpush1.bf16.msra.mxu0 0
    %1667 = vmatprep.subr.bf16.mxu0 0
    %1668 = vmatpush1.bf16.msra.mxu0 0
    %1669 = vmatprep.mubr.bf16.mxu0 0
    %1670 = vmatmul.mubr.bf16.gmra.mrb[0].mxu0 %v1550
    %v1671 = vpop.f32.mrb[0].mxu0
    %v1672 = vadd.f32 %v1587, %v1671
    %v1673 = vpop.f32.mrb[0].mxu0
    %v1674 = vpop.f32.mrb[0].mxu0
    %v1675 = vadd.f32 %v1587, %v1674
    %v1676 = vpop.f32.mrb[0].mxu0
    %1677 = vmatprep.mubr.bf16.mxu0 0
    %1678 = vmatmul.mubr.bf16.gmra.mrb[0].mxu0 %v1551
    %v1679 = vpop.f32.mrb[0].mxu0
    %v1680 = vadd.f32 %v1587, %v1679
    %v1681 = vpop.f32.mrb[0].mxu0
    %v1682 = vpop.f32.mrb[0].mxu0
    %v1683 = vadd.f32 %v1587, %v1682
    %v1684 = vpop.f32.mrb[0].mxu0
    %1685 = vmatprep.mubr.bf16.mxu0 0
    %1686 = vmatmul.mubr.bf16.gmra.mrb[0].mxu0 %v1552
    %v1687 = vpop.f32.mrb[0].mxu0
    %v1688 = vadd.f32 %v1587, %v1687
    %v1689 = vpop.f32.mrb[0].mxu0
    %v1690 = vpop.f32.mrb[0].mxu0
    %v1691 = vadd.f32 %v1587, %v1690
    %v1692 = vpop.f32.mrb[0].mxu0
    %1693 = vmatprep.mubr.bf16.mxu0 0
    %1694 = vmatmul.mubr.bf16.gmra.mrb[0].mxu0 %v1553
    %v1695 = vpop.f32.mrb[0].mxu0
    %v1696 = vadd.f32 %v1587, %v1695
    %v1697 = vpop.f32.mrb[0].mxu0
    %v1698 = vpop.f32.mrb[0].mxu0
    %v1699 = vadd.f32 %v1587, %v1698
    %v1700 = vpop.f32.mrb[0].mxu0
    %1701 = vmatprep.mubr.bf16.mxu0 0
    %1702 = vmatmul.mubr.bf16.gmra.mrb[0].mxu0 %v1554
    %v1703 = vpop.f32.mrb[0].mxu0
    %v1704 = vadd.f32 %v1587, %v1703
    %v1705 = vpop.f32.mrb[0].mxu0
    %v1706 = vpop.f32.mrb[0].mxu0
    %v1707 = vadd.f32 %v1587, %v1706
    %v1708 = vpop.f32.mrb[0].mxu0
    %1709 = vmatprep.mubr.bf16.mxu0 0
    %1710 = vmatmul.mubr.bf16.gmra.mrb[0].mxu0 %v1555
    %v1711 = vpop.f32.mrb[0].mxu0
    %v1712 = vadd.f32 %v1587, %v1711
    %v1713 = vpop.f32.mrb[0].mxu0
    %v1714 = vpop.f32.mrb[0].mxu0
    %v1715 = vadd.f32 %v1587, %v1714
    %v1716 = vpop.f32.mrb[0].mxu0
    %1717 = vmatprep.mubr.bf16.mxu0 0
    %1718 = vmatmul.mubr.bf16.gmra.mrb[0].mxu0 %v1556
    %v1719 = vpop.f32.mrb[0].mxu0
    %v1720 = vadd.f32 %v1587, %v1719
    %v1721 = vpop.f32.mrb[0].mxu0
    %v1722 = vpop.f32.mrb[0].mxu0
    %v1723 = vadd.f32 %v1587, %v1722
    %v1724 = vpop.f32.mrb[0].mxu0
    %1725 = vmatprep.mubr.bf16.mxu0 0
    %1726 = vmatmul.mubr.bf16.gmra.mrb[0].mxu0 %v1557
    %v1727 = vpop.f32.mrb[0].mxu0
    %v1728 = vadd.f32 %v1587, %v1727
    %v1729 = vpop.f32.mrb[0].mxu0
    %v1730 = vpop.f32.mrb[0].mxu0
    %v1731 = vadd.f32 %v1587, %v1730
    %v1732 = vpop.f32.mrb[0].mxu0
    %1733 = vmatprep.mubr.bf16.mxu0 0
    %1734 = vmatmul.mubr.bf16.gmra.mrb[0].mxu0 %v1558
    %v1735 = vpop.f32.mrb[0].mxu0
    %v1736 = vadd.f32 %v1587, %v1735
    %v1737 = vpop.f32.mrb[0].mxu0
    %v1738 = vpop.f32.mrb[0].mxu0
    %v1739 = vadd.f32 %v1587, %v1738
    %v1740 = vpop.f32.mrb[0].mxu0
    %1741 = vmatprep.mubr.bf16.mxu0 0
    %1742 = vmatmul.mubr.bf16.gmra.mrb[0].mxu0 %v1559
    %v1743 = vpop.f32.mrb[0].mxu0
    %v1744 = vadd.f32 %v1587, %v1743
    %v1745 = vpop.f32.mrb[0].mxu0
    %v1746 = vpop.f32.mrb[0].mxu0
    %v1747 = vadd.f32 %v1587, %v1746
    %v1748 = vpop.f32.mrb[0].mxu0
    %1749 = vmatprep.mubr.bf16.mxu0 0
    %1750 = vmatmul.mubr.bf16.gmra.mrb[0].mxu0 %v1560
    %v1751 = vpop.f32.mrb[0].mxu0
    %v1752 = vadd.f32 %v1587, %v1751
    %v1753 = vpop.f32.mrb[0].mxu0
    %v1754 = vpop.f32.mrb[0].mxu0
    %v1755 = vadd.f32 %v1587, %v1754
    %v1756 = vpop.f32.mrb[0].mxu0
    %1757 = vmatprep.mubr.bf16.mxu0 0
    %1758 = vmatmul.mubr.bf16.gmra.mrb[0].mxu0 %v1561
    %v1759 = vpop.f32.mrb[0].mxu0
    %v1760 = vadd.f32 %v1587, %v1759
    %v1761 = vpop.f32.mrb[0].mxu0
    %v1762 = vpop.f32.mrb[0].mxu0
    %v1763 = vadd.f32 %v1587, %v1762
    %v1764 = vpop.f32.mrb[0].mxu0
    %1765 = vmatprep.mubr.bf16.mxu0 0
    %1766 = vmatmul.mubr.bf16.gmra.mrb[0].mxu0 %v1562
    %v1767 = vpop.f32.mrb[0].mxu0
    %v1768 = vadd.f32 %v1587, %v1767
    %v1769 = vpop.f32.mrb[0].mxu0
    %v1770 = vpop.f32.mrb[0].mxu0
    %v1771 = vadd.f32 %v1587, %v1770
    %v1772 = vpop.f32.mrb[0].mxu0
    %1773 = vmatprep.mubr.bf16.mxu0 0
    %1774 = vmatmul.mubr.bf16.gmra.mrb[0].mxu0 %v1563
    %v1775 = vpop.f32.mrb[0].mxu0
    %v1776 = vadd.f32 %v1587, %v1775
    %v1777 = vpop.f32.mrb[0].mxu0
    %v1778 = vpop.f32.mrb[0].mxu0
    %v1779 = vadd.f32 %v1587, %v1778
    %v1780 = vpop.f32.mrb[0].mxu0
    %1781 = vmatprep.mubr.bf16.mxu0 0
    %1782 = vmatmul.mubr.bf16.gmra.mrb[0].mxu0 %v1564
    %v1783 = vpop.f32.mrb[0].mxu0
    %v1784 = vadd.f32 %v1587, %v1783
    %v1785 = vpop.f32.mrb[0].mxu0
    %v1786 = vpop.f32.mrb[0].mxu0
    %v1787 = vadd.f32 %v1587, %v1786
    %v1788 = vpop.f32.mrb[0].mxu0
    %1789 = vmatprep.mubr.bf16.mxu0 0
    %1790 = vmatmul.mubr.bf16.gmra.mrb[0].mxu0 %v1565
    %v1791 = vpop.f32.mrb[0].mxu0
    %v1792 = vadd.f32 %v1587, %v1791
    %v1793 = vpop.f32.mrb[0].mxu0
    %v1794 = vpop.f32.mrb[0].mxu0
    %v1795 = vadd.f32 %v1587, %v1794
    %v1796 = vpop.f32.mrb[0].mxu0
    %1797 = vdwg.mxu0
    %1798 = vst [vmem:[%s6] sm:$0xff] %v1672
    %1799 = vst [vmem:[%s6 + $0x8] sm:$0xff] %v1675
    %1800 = vst [vmem:[%s6 + $0x10] sm:$0xff] %v1680
    %1801 = vst [vmem:[%s6 + $0x18] sm:$0xff] %v1683
    %1802 = vst [vmem:[%s6 + $0x20] sm:$0xff] %v1688
    %1803 = vst [vmem:[%s6 + $0x28] sm:$0xff] %v1691
    %1804 = vst [vmem:[%s6 + $0x30] sm:$0xff] %v1696
    %1805 = vst [vmem:[%s6 + $0x38] sm:$0xff] %v1699
    %1806 = vst [vmem:[%s6 + $0x40] sm:$0xff] %v1704
    %1807 = vst [vmem:[%s6 + $0x48] sm:$0xff] %v1707
    %1808 = vst [vmem:[%s6 + $0x50] sm:$0xff] %v1712
    %1809 = vst [vmem:[%s6 + $0x58] sm:$0xff] %v1715
    %1810 = vst [vmem:[%s6 + $0x60] sm:$0xff] %v1720
    %1811 = vst [vmem:[%s6 + $0x68] sm:$0xff] %v1723
    %1812 = vst [vmem:[%s6 + $0x70] sm:$0xff] %v1728
    %1813 = vst [vmem:[%s6 + $0x78] sm:$0xff] %v1731
    %1814 = vst [vmem:[%s6 + $0x80] sm:$0xff] %v1736
    %1815 = vst [vmem:[%s6 + $0x88] sm:$0xff] %v1739
    %1816 = vst [vmem:[%s6 + $0x90] sm:$0xff] %v1744
    %1817 = vst [vmem:[%s6 + $0x98] sm:$0xff] %v1747
    %1818 = vst [vmem:[%s6 + $0xa0] sm:$0xff] %v1752
    %1819 = vst [vmem:[%s6 + $0xa8] sm:$0xff] %v1755
    %1820 = vst [vmem:[%s6 + $0xb0] sm:$0xff] %v1760
    %1821 = vst [vmem:[%s6 + $0xb8] sm:$0xff] %v1763
    %1822 = vst [vmem:[%s6 + $0xc0] sm:$0xff] %v1768
    %1823 = vst [vmem:[%s6 + $0xc8] sm:$0xff] %v1771
    %1824 = vst [vmem:[%s6 + $0xd0] sm:$0xff] %v1776
    %1825 = vst [vmem:[%s6 + $0xd8] sm:$0xff] %v1779
    %1826 = vst [vmem:[%s6 + $0xe0] sm:$0xff] %v1784
    %1827 = vst [vmem:[%s6 + $0xe8] sm:$0xff] %v1787
    %1828 = vst [vmem:[%s6 + $0xf0] sm:$0xff] %v1792
    %1829 = vst [vmem:[%s6 + $0xf8] sm:$0xff] %v1795
  $region33: #{gin_conv.1} parent=0 // pred_fallthru
    _
  // Predicated region
  $region34: #{gin_conv.1} parent=0 // pred_check
    _
  $region35: #{gin_conv.1} parent=0 // pred_check_branch
    %1831 = sbr.rel (0) target = $region37
  $region36: #{gin_conv.1} parent=0 // pred_region
    _
  $region37: #{gin_conv.1} parent=0 // pred_fallthru
    _
  // Predicated region
  $region38: #{gin_conv.1} parent=0 // pred_check
    _
  $region39: #{gin_conv.1} parent=0 // pred_check_branch
    %1833 = sbr.rel (0) target = $region41
  $region40: #{gin_conv.1} parent=0 // pred_region
    _
  $region41: #{gin_conv.1} parent=0 // pred_fallthru
    _

</llo_original>
